<compile_context>
chip_gen: v7x
topology: tpu7x:2x2x1
jax: 0.10.0
libtpu: 0.0.40
codegen_flags: <defaults>
</compile_context>

<pallas_src>
import functools

import jax
import jax.numpy as jnp
from jax.experimental import pallas as pl
from jax.experimental.pallas import tpu as pltpu


def _softmoe_kernel(x_ref, wg_ref, bg_ref, wslab_ref, be_ref, gamma_ref,
                    beta_ref, o_ref, *, num_experts, d_model, eps,
                    compute_dtype):
    E, D = num_experts, d_model

    x_f32 = x_ref[...].astype(jnp.float32)        # residual / LayerNorm operand
    x_mm = x_f32.astype(compute_dtype)            # matmul operand only

    # ---- gate: linear D -> E, exact softmax over experts (f32) ----
    logits = jnp.dot(x_mm, wg_ref[...], preferred_element_type=jnp.float32)
    logits = logits + bg_ref[...].astype(jnp.float32)            # (TM, E)
    logits = logits - jnp.max(logits, axis=-1, keepdims=True)
    p = jnp.exp(logits)
    gate = p / jnp.sum(p, axis=-1, keepdims=True)                # (TM, E) f32

    # ---- experts: single fused lane-dense MXU matmul ----
    # wslab is (D, E*D); columns [e*D:(e+1)*D] hold expert e's weight matrix.
    slab = jnp.dot(x_mm, wslab_ref[...], preferred_element_type=jnp.float32)

    # Gated combine + expert bias on the VPU (no K=E MXU matmul; static,
    # lane-aligned slices since D is a multiple of 128 and E is small).
    be = be_ref[...].astype(jnp.float32)                         # (E, D)
    moe = gate[:, 0:1] * (slab[:, 0:D] + be[0, :])
    for e in range(1, E):
        moe = moe + gate[:, e:e + 1] * (slab[:, e * D:(e + 1) * D] + be[e, :])

    # ---- dropout (identity at inference) + residual + LayerNorm (f32) ----
    h = x_f32 + moe
    mean = jnp.mean(h, axis=-1, keepdims=True)
    centered = h - mean
    var = jnp.mean(centered * centered, axis=-1, keepdims=True)
    y = centered * jax.lax.rsqrt(var + eps)
    y = y * gamma_ref[...].astype(jnp.float32) + beta_ref[...].astype(jnp.float32)

    o_ref[...] = y.astype(o_ref.dtype)


def prepare_params(params, *, compute_dtype=jnp.float32):
    """One-time repack/cast of SoftMoE parameters for the kernel.

    Returns (wg, bg, wslab, be, gamma, beta).  The (E, D, D) expert weights
    are repacked into a lane-dense (D, E*D) slab and cast to compute_dtype.
    Do this once at parameter-load time (it is an HBM-level transpose of
    E*D^2 elements), not inside the per-step forward call.
    """
    wg, bg, we, be, gamma, beta = params
    E, D, _ = we.shape
    wslab = jnp.transpose(we, (1, 0, 2)).reshape(D, E * D)
    return (wg.astype(compute_dtype), bg.astype(jnp.float32),
            wslab.astype(compute_dtype), be.astype(jnp.float32),
            gamma.astype(jnp.float32), beta.astype(jnp.float32))


def _const_spec(shape):
    # Grid-invariant operand: constant index_map; single-buffered because
    # there is no steady-state DMA to overlap (halves its resident VMEM).
    return pl.BlockSpec(shape, lambda i: (0, 0), pipeline_mode=pl.Buffered(1))


def _vmem_limit_bytes(tm, D, E, x_dtype, w_dtype, out_dtype):
    xi = jnp.dtype(x_dtype).itemsize
    wi = jnp.dtype(w_dtype).itemsize
    oi = jnp.dtype(out_dtype).itemsize
    io = 2 * tm * D * xi + 2 * tm * D * oi                 # double-buffered x/out tiles
    consts = (E * D * D + E * D) * wi + (E + E * D + 2 * D) * 4   # single-buffered
    live = tm * E * D * 4 + 6 * tm * D * 4                 # slab value + f32 temporaries
    need = io + consts + live + (2 << 20)                  # headroom / compiler scratch
    # NB: physical VMEM is 128 MiB on v5e/v6e but only 64 MiB on v7x; configs
    # that don't fit should use the expert-grid-axis variant (see TODO above).
    return int(min(need, 96 * 1024 * 1024))


def softmoe_forward(x, prepared_params, *, num_experts, tm=512, eps=1e-5,
                    out_dtype=None):
    """x: (B, N, D) (f32 recommended). prepared_params: from prepare_params().

    The matmul operands run in prepared_params' dtype (e.g. bf16 on
    v6e/v7x/v5e); accumulation, softmax, residual and LayerNorm stay f32.
    out_dtype (default x.dtype) can be bf16 to cut writeback bytes.
    """
    B, N, D = x.shape
    BN = B * N
    E = num_experts

    wg, bg, wslab, be, gamma, beta = prepared_params
    assert wslab.shape == (D, E * D), "expected prepared (D, E*D) weight slab"
    cdt = wslab.dtype
    out_dtype = x.dtype if out_dtype is None else out_dtype

    # Row alignment: 8 sublanes for f32 tiles, 16 when any 16-bit dtype is
    # involved (packed sublane layout).  On v7x, prefer tm <= BN // 4 for
    # production token counts so the 'parallel' axis still spans both
    # TensorCores and the pipeline has depth.
    row_align = 16 if 2 in (jnp.dtype(cdt).itemsize,
                            jnp.dtype(out_dtype).itemsize,
                            jnp.dtype(x.dtype).itemsize) else 8
    tm = min(tm, BN)
    assert BN % tm == 0, "token count must be divisible by the tile size"
    assert tm % row_align == 0 or tm == BN, \
        f"tile rows must be a multiple of {row_align}"

    x_flat = x.reshape(BN, D)   # no dtype cast here: keep HBM traffic minimal

    # Advisory cost estimate (lets XLA overlap neighboring ops).
    w_isz = jnp.dtype(cdt).itemsize
    flops = int(2 * BN * D * E              # gate matmul
                + 2 * BN * D * E * D        # fused expert slab matmul
                + BN * (3 * E * D + 10 * D))  # combine + LayerNorm elementwise
    transcendentals = int(BN * (E + 1))     # exp + rsqrt
    bytes_accessed = int(BN * D * jnp.dtype(x.dtype).itemsize
                         + BN * D * jnp.dtype(out_dtype).itemsize
                         + (E * D * D + E * D) * w_isz
                         + (E + E * D + 2 * D) * 4)
    cost = pl.CostEstimate(flops=flops, transcendentals=transcendentals,
                           bytes_accessed=bytes_accessed)

    kernel = functools.partial(_softmoe_kernel, num_experts=E, d_model=D,
                               eps=eps, compute_dtype=cdt)

    out_flat = pl.pallas_call(
        kernel,
        out_shape=jax.ShapeDtypeStruct((BN, D), out_dtype),
        grid_spec=pltpu.PrefetchScalarGridSpec(
            num_scalar_prefetch=0,
            grid=(BN // tm,),
            in_specs=[
                pl.BlockSpec((tm, D), lambda i: (i, 0)),    # x tile (streamed)
                _const_spec((D, E)),                        # gate weight
                _const_spec((1, E)),                        # gate bias
                _const_spec((D, E * D)),                    # expert weight slab
                _const_spec((E, D)),                        # expert biases
                _const_spec((1, D)),                        # LN gamma
                _const_spec((1, D)),                        # LN beta
            ],
            out_specs=pl.BlockSpec((tm, D), lambda i: (i, 0)),
        ),
        compiler_params=pltpu.CompilerParams(
            dimension_semantics=("parallel",),
            vmem_limit_bytes=_vmem_limit_bytes(tm, D, E, x.dtype, cdt,
                                               out_dtype)),
        cost_estimate=cost,
    )(x_flat, wg, bg, wslab, be, gamma, beta)

    return out_flat.reshape(B, N, D)


def _reference(x, params, num_experts, eps=1e-5):
    """Pure-JAX reference matching the PyTorch forward (eval mode)."""
    wg, bg, we, be, gamma, beta = params
    B, N, D = x.shape
    xf = x.reshape(B * N, D)
    logits = xf @ wg + bg[0]
    gate = jax.nn.softmax(logits, axis=-1)
    expert_outs = jnp.einsum("td,edo->teo", xf, we) + be[None, :, :]
    out = jnp.sum(gate[:, :, None] * expert_outs, axis=1)
    h = xf + out
    mean = h.mean(-1, keepdims=True)
    var = ((h - mean) ** 2).mean(-1, keepdims=True)
    y = (h - mean) / jnp.sqrt(var + eps) * gamma[0] + beta[0]
    return y.reshape(B, N, D)


def init_params(key, embed_dim, num_experts):
    D, E = embed_dim, num_experts
    ks = jax.random.split(key, 4)
    scale = 1.0 / jnp.sqrt(D)
    # gate Linear(D, E): stored transposed as (D, E)
    wg = jax.random.uniform(ks[0], (D, E), jnp.float32, -scale, scale)
    bg = jax.random.uniform(ks[1], (1, E), jnp.float32, -scale, scale)
    # experts: E x Linear(D, D): stored transposed as (E, D, D)
    we = jax.random.uniform(ks[2], (E, D, D), jnp.float32, -scale, scale)
    be = jax.random.uniform(ks[3], (E, D), jnp.float32, -scale, scale)
    # LayerNorm affine params
    gamma = jnp.ones((1, D), jnp.float32)
    beta = jnp.zeros((1, D), jnp.float32)
    return (wg, bg, we, be, gamma, beta)


if __name__ == "__main__":
    # D is a multiple of 128 so output tiles are lane-dense; shapes kept small.
    B, N, D = 2, 64, 128
    NUM_EXPERTS = 4

    key = jax.random.PRNGKey(0)
    kx, kp = jax.random.split(key)
    x = jax.random.normal(kx, (B, N, D), jnp.float32)
    params = init_params(kp, D, NUM_EXPERTS)

    ref = _reference(x, params, NUM_EXPERTS)

    # f32 compute path. Tolerance covers TPU default matmul precision on the
    # reference side; the kernel's softmax/LayerNorm are exact f32.
    prepared_f32 = prepare_params(params, compute_dtype=jnp.float32)
    out = softmoe_forward(x, prepared_f32, num_experts=NUM_EXPERTS)
    out = jax.block_until_ready(out)
    assert out.shape == (B, N, D)
    assert jnp.allclose(out, ref, atol=1e-2, rtol=1e-2), "f32 mismatch vs reference"

    # bf16 matmul-operand path (recommended on v5e/v6e/v7x): x stays f32
    # through residual/LayerNorm; output emitted in bf16 to cut HBM writeback.
    prepared_bf16 = prepare_params(params, compute_dtype=jnp.bfloat16)
    out_bf16 = softmoe_forward(x, prepared_bf16, num_experts=NUM_EXPERTS,
                               out_dtype=jnp.bfloat16)
    out_bf16 = jax.block_until_ready(out_bf16)
    assert jnp.allclose(out_bf16.astype(jnp.float32), ref,
                        atol=5e-2, rtol=5e-2), "bf16 mismatch vs reference"

    print("KERNEL_OK")
</pallas_src>

<mosaic_0001>
module attributes {stable_mosaic.version = 11 : i64} {
  func.func @_softmoe_kernel(%arg0: i32, %arg1: memref<128x128xf32, #tpu.memory_space<vmem>>, %arg2: memref<128x4xf32, #tpu.memory_space<vmem>>, %arg3: memref<1x4xf32, #tpu.memory_space<vmem>>, %arg4: memref<128x512xf32, #tpu.memory_space<vmem>>, %arg5: memref<4x128xf32, #tpu.memory_space<vmem>>, %arg6: memref<1x128xf32, #tpu.memory_space<vmem>>, %arg7: memref<1x128xf32, #tpu.memory_space<vmem>>, %arg8: memref<128x128xf32, #tpu.memory_space<vmem>>) attributes {dimension_semantics = [#tpu.dimension_semantics<parallel>], iteration_bounds = array<i64: 1>, scalar_prefetch = 0 : i64, scratch_operands = 0 : i64, tpu.core_type = #tpu.core_type<tc>, window_params = [{transform_indices = @transform_0, window_bounds = array<i64: 128, 128>}, {pipeline_mode = #tpu.pipeline_mode<synchronous>, transform_indices = @transform_1, window_bounds = array<i64: 128, 4>}, {pipeline_mode = #tpu.pipeline_mode<synchronous>, transform_indices = @transform_2, window_bounds = array<i64: 1, 4>}, {pipeline_mode = #tpu.pipeline_mode<synchronous>, transform_indices = @transform_3, window_bounds = array<i64: 128, 512>}, {pipeline_mode = #tpu.pipeline_mode<synchronous>, transform_indices = @transform_4, window_bounds = array<i64: 4, 128>}, {pipeline_mode = #tpu.pipeline_mode<synchronous>, transform_indices = @transform_5, window_bounds = array<i64: 1, 128>}, {pipeline_mode = #tpu.pipeline_mode<synchronous>, transform_indices = @transform_6, window_bounds = array<i64: 1, 128>}, {transform_indices = @transform_7, window_bounds = array<i64: 128, 128>}]} {
    %c0 = arith.constant 0 : index
    %c0_0 = arith.constant 0 : index
    %0 = vector.load %arg1[%c0, %c0_0] : memref<128x128xf32, #tpu.memory_space<vmem>>, vector<128x128xf32>
    %c0_1 = arith.constant 0 : index
    %c0_2 = arith.constant 0 : index
    %1 = vector.load %arg2[%c0_1, %c0_2] : memref<128x4xf32, #tpu.memory_space<vmem>>, vector<128x4xf32>
    %cst = arith.constant dense<0.000000e+00> : vector<128x4xf32>
    %2 = tpu.matmul %0, %1, %cst {dimension_numbers = #tpu.dot_dimension_numbers<[1], [0], [0], [1], [0, 0, 1, 1], [], []>} : vector<128x128xf32>, vector<128x4xf32>, vector<128x4xf32> -> vector<128x4xf32>
    %c0_3 = arith.constant 0 : index
    %c0_4 = arith.constant 0 : index
    %3 = vector.load %arg3[%c0_3, %c0_4] : memref<1x4xf32, #tpu.memory_space<vmem>>, vector<1x4xf32>
    %4 = vector.broadcast %3 : vector<1x4xf32> to vector<128x4xf32>
    %5 = arith.addf %2, %4 : vector<128x4xf32>
    %cst_5 = arith.constant dense<0xFF800000> : vector<128xf32>
    %6 = vector.multi_reduction <maximumf>, %5, %cst_5 [1] : vector<128x4xf32> to vector<128xf32>
    %7 = vector.shape_cast %6 : vector<128xf32> to vector<128x1xf32>
    %8 = vector.broadcast %7 : vector<128x1xf32> to vector<128x4xf32>
    %9 = arith.subf %5, %8 : vector<128x4xf32>
    %10 = math.exp %9 : vector<128x4xf32>
    %cst_6 = arith.constant dense<0.000000e+00> : vector<128xf32>
    %11 = vector.multi_reduction <add>, %10, %cst_6 [1] : vector<128x4xf32> to vector<128xf32>
    %12 = vector.shape_cast %11 : vector<128xf32> to vector<128x1xf32>
    %13 = vector.broadcast %12 : vector<128x1xf32> to vector<128x4xf32>
    %14 = arith.divf %10, %13 : vector<128x4xf32>
    %c0_7 = arith.constant 0 : index
    %c0_8 = arith.constant 0 : index
    %15 = vector.load %arg4[%c0_7, %c0_8] : memref<128x512xf32, #tpu.memory_space<vmem>>, vector<128x512xf32>
    %cst_9 = arith.constant dense<0.000000e+00> : vector<128x512xf32>
    %16 = tpu.matmul %0, %15, %cst_9 {dimension_numbers = #tpu.dot_dimension_numbers<[1], [0], [0], [1], [0, 0, 1, 1], [], []>} : vector<128x128xf32>, vector<128x512xf32>, vector<128x512xf32> -> vector<128x512xf32>
    %c0_10 = arith.constant 0 : index
    %c0_11 = arith.constant 0 : index
    %17 = vector.load %arg5[%c0_10, %c0_11] : memref<4x128xf32, #tpu.memory_space<vmem>>, vector<4x128xf32>
    %18 = vector.extract_strided_slice %14 {offsets = [0, 0], sizes = [128, 1], strides = [1, 1]} : vector<128x4xf32> to vector<128x1xf32>
    %19 = vector.extract_strided_slice %16 {offsets = [0, 0], sizes = [128, 128], strides = [1, 1]} : vector<128x512xf32> to vector<128x128xf32>
    %20 = vector.extract_strided_slice %17 {offsets = [0, 0], sizes = [1, 128], strides = [1, 1]} : vector<4x128xf32> to vector<1x128xf32>
    %21 = vector.shape_cast %20 : vector<1x128xf32> to vector<128xf32>
    %22 = vector.shape_cast %21 : vector<128xf32> to vector<1x128xf32>
    %23 = vector.broadcast %22 : vector<1x128xf32> to vector<128x128xf32>
    %24 = arith.addf %19, %23 : vector<128x128xf32>
    %25 = vector.broadcast %18 : vector<128x1xf32> to vector<128x128xf32>
    %26 = arith.mulf %25, %24 : vector<128x128xf32>
    %27 = vector.extract_strided_slice %14 {offsets = [0, 1], sizes = [128, 1], strides = [1, 1]} : vector<128x4xf32> to vector<128x1xf32>
    %28 = vector.extract_strided_slice %16 {offsets = [0, 128], sizes = [128, 128], strides = [1, 1]} : vector<128x512xf32> to vector<128x128xf32>
    %29 = vector.extract_strided_slice %17 {offsets = [1, 0], sizes = [1, 128], strides = [1, 1]} : vector<4x128xf32> to vector<1x128xf32>
    %30 = vector.shape_cast %29 : vector<1x128xf32> to vector<128xf32>
    %31 = vector.shape_cast %30 : vector<128xf32> to vector<1x128xf32>
    %32 = vector.broadcast %31 : vector<1x128xf32> to vector<128x128xf32>
    %33 = arith.addf %28, %32 : vector<128x128xf32>
    %34 = vector.broadcast %27 : vector<128x1xf32> to vector<128x128xf32>
    %35 = arith.mulf %34, %33 : vector<128x128xf32>
    %36 = arith.addf %26, %35 : vector<128x128xf32>
    %37 = vector.extract_strided_slice %14 {offsets = [0, 2], sizes = [128, 1], strides = [1, 1]} : vector<128x4xf32> to vector<128x1xf32>
    %38 = vector.extract_strided_slice %16 {offsets = [0, 256], sizes = [128, 128], strides = [1, 1]} : vector<128x512xf32> to vector<128x128xf32>
    %39 = vector.extract_strided_slice %17 {offsets = [2, 0], sizes = [1, 128], strides = [1, 1]} : vector<4x128xf32> to vector<1x128xf32>
    %40 = vector.shape_cast %39 : vector<1x128xf32> to vector<128xf32>
    %41 = vector.shape_cast %40 : vector<128xf32> to vector<1x128xf32>
    %42 = vector.broadcast %41 : vector<1x128xf32> to vector<128x128xf32>
    %43 = arith.addf %38, %42 : vector<128x128xf32>
    %44 = vector.broadcast %37 : vector<128x1xf32> to vector<128x128xf32>
    %45 = arith.mulf %44, %43 : vector<128x128xf32>
    %46 = arith.addf %36, %45 : vector<128x128xf32>
    %47 = vector.extract_strided_slice %14 {offsets = [0, 3], sizes = [128, 1], strides = [1, 1]} : vector<128x4xf32> to vector<128x1xf32>
    %48 = vector.extract_strided_slice %16 {offsets = [0, 384], sizes = [128, 128], strides = [1, 1]} : vector<128x512xf32> to vector<128x128xf32>
    %49 = vector.extract_strided_slice %17 {offsets = [3, 0], sizes = [1, 128], strides = [1, 1]} : vector<4x128xf32> to vector<1x128xf32>
    %50 = vector.shape_cast %49 : vector<1x128xf32> to vector<128xf32>
    %51 = vector.shape_cast %50 : vector<128xf32> to vector<1x128xf32>
    %52 = vector.broadcast %51 : vector<1x128xf32> to vector<128x128xf32>
    %53 = arith.addf %48, %52 : vector<128x128xf32>
    %54 = vector.broadcast %47 : vector<128x1xf32> to vector<128x128xf32>
    %55 = arith.mulf %54, %53 : vector<128x128xf32>
    %56 = arith.addf %46, %55 : vector<128x128xf32>
    %57 = arith.addf %0, %56 : vector<128x128xf32>
    %cst_12 = arith.constant dense<0.000000e+00> : vector<128xf32>
    %58 = vector.multi_reduction <add>, %57, %cst_12 [1] : vector<128x128xf32> to vector<128xf32>
    %59 = vector.shape_cast %58 : vector<128xf32> to vector<128x1xf32>
    %cst_13 = arith.constant 1.280000e+02 : f32
    %60 = vector.broadcast %cst_13 : f32 to vector<128x1xf32>
    %61 = arith.divf %59, %60 : vector<128x1xf32>
    %62 = vector.broadcast %61 : vector<128x1xf32> to vector<128x128xf32>
    %63 = arith.subf %57, %62 : vector<128x128xf32>
    %64 = arith.mulf %63, %63 : vector<128x128xf32>
    %cst_14 = arith.constant dense<0.000000e+00> : vector<128xf32>
    %65 = vector.multi_reduction <add>, %64, %cst_14 [1] : vector<128x128xf32> to vector<128xf32>
    %66 = vector.shape_cast %65 : vector<128xf32> to vector<128x1xf32>
    %cst_15 = arith.constant 1.280000e+02 : f32
    %67 = vector.broadcast %cst_15 : f32 to vector<128x1xf32>
    %68 = arith.divf %66, %67 : vector<128x1xf32>
    %cst_16 = arith.constant 9.99999974E-6 : f32
    %69 = vector.broadcast %cst_16 : f32 to vector<128x1xf32>
    %70 = arith.addf %68, %69 : vector<128x1xf32>
    %71 = math.rsqrt %70 : vector<128x1xf32>
    %72 = vector.broadcast %71 : vector<128x1xf32> to vector<128x128xf32>
    %73 = arith.mulf %63, %72 : vector<128x128xf32>
    %c0_17 = arith.constant 0 : index
    %c0_18 = arith.constant 0 : index
    %74 = vector.load %arg6[%c0_17, %c0_18] : memref<1x128xf32, #tpu.memory_space<vmem>>, vector<1x128xf32>
    %75 = vector.broadcast %74 : vector<1x128xf32> to vector<128x128xf32>
    %76 = arith.mulf %73, %75 : vector<128x128xf32>
    %c0_19 = arith.constant 0 : index
    %c0_20 = arith.constant 0 : index
    %77 = vector.load %arg7[%c0_19, %c0_20] : memref<1x128xf32, #tpu.memory_space<vmem>>, vector<1x128xf32>
    %78 = vector.broadcast %77 : vector<1x128xf32> to vector<128x128xf32>
    %79 = arith.addf %76, %78 : vector<128x128xf32>
    %c0_21 = arith.constant 0 : index
    %c0_22 = arith.constant 0 : index
    %80 = vector.load %arg8[%c0_21, %c0_22] : memref<128x128xf32, #tpu.memory_space<vmem>>, vector<128x128xf32>
    tpu.vector_store %arg8[%c0_21, %c0_22], %79 {strides = array<i32>} : memref<128x128xf32, #tpu.memory_space<vmem>>, vector<128x128xf32>,
    return
  }
  func.func @transform_0(%arg0: i32) -> (i32, i32) {
    %c0_i32 = arith.constant 0 : i32
    %c0_i32_0 = arith.constant 0 : i32
    return %arg0, %c0_i32 : i32, i32
  }
  func.func @transform_1(%arg0: i32) -> (i32, i32) {
    %c0_i32 = arith.constant 0 : i32
    %c0_i32_0 = arith.constant 0 : i32
    %c0_i32_1 = arith.constant 0 : i32
    return %c0_i32, %c0_i32_0 : i32, i32
  }
  func.func @transform_2(%arg0: i32) -> (i32, i32) {
    %c0_i32 = arith.constant 0 : i32
    %c0_i32_0 = arith.constant 0 : i32
    %c0_i32_1 = arith.constant 0 : i32
    return %c0_i32, %c0_i32_0 : i32, i32
  }
  func.func @transform_3(%arg0: i32) -> (i32, i32) {
    %c0_i32 = arith.constant 0 : i32
    %c0_i32_0 = arith.constant 0 : i32
    %c0_i32_1 = arith.constant 0 : i32
    return %c0_i32, %c0_i32_0 : i32, i32
  }
  func.func @transform_4(%arg0: i32) -> (i32, i32) {
    %c0_i32 = arith.constant 0 : i32
    %c0_i32_0 = arith.constant 0 : i32
    %c0_i32_1 = arith.constant 0 : i32
    return %c0_i32, %c0_i32_0 : i32, i32
  }
  func.func @transform_5(%arg0: i32) -> (i32, i32) {
    %c0_i32 = arith.constant 0 : i32
    %c0_i32_0 = arith.constant 0 : i32
    %c0_i32_1 = arith.constant 0 : i32
    return %c0_i32, %c0_i32_0 : i32, i32
  }
  func.func @transform_6(%arg0: i32) -> (i32, i32) {
    %c0_i32 = arith.constant 0 : i32
    %c0_i32_0 = arith.constant 0 : i32
    %c0_i32_1 = arith.constant 0 : i32
    return %c0_i32, %c0_i32_0 : i32, i32
  }
  func.func @transform_7(%arg0: i32) -> (i32, i32) {
    %c0_i32 = arith.constant 0 : i32
    %c0_i32_0 = arith.constant 0 : i32
    return %arg0, %c0_i32 : i32, i32
  }
}

</mosaic_0001>

<llo_original>
// kernel: tpu_custom_call.1
$region0: #{tpu_custom_call.1}
  #allocation0 [shape = 'u32[]', space=smem, size = 0x4, offset = 0x4, fixed_abs, tag = 'smem constant byte address 0x4 - core index']
  #allocation1 [shape = 'u32[144,128]{1,0:T(1,128)}', space=vmem, size = 0x12000, scoped, tag = 'internal scratch']
  %s0 = inlined_call_operand.vmem [shape: f32[128,128], index: 0, kind: input, shape index: {}]
  %s1 = inlined_call_operand.vmem [shape: f32[128,4], index: 1, kind: input, shape index: {}]
  %s2 = inlined_call_operand.vmem [shape: f32[1,4], index: 2, kind: input, shape index: {}]
  %s3 = inlined_call_operand.hbm [shape: f32[128,512], index: 3, kind: input, shape index: {}]
  %s4 = inlined_call_operand.vmem [shape: f32[4,128], index: 4, kind: input, shape index: {}]
  %s5 = inlined_call_operand.vmem [shape: f32[1,128], index: 5, kind: input, shape index: {}]
  %s6 = inlined_call_operand.vmem [shape: f32[1,128], index: 6, kind: input, shape index: {}]
  %s7 = inlined_call_operand.hbm [shape: f32[128,128], index: 7, kind: output, shape index: {}]
  %s8 = sld [smem:[#allocation0]]
  $region42: #{tpu_custom_call.1} parent=0
    _
  %s10 = ssub.s32 1, %s8
  %s11 = scalar_select 0, %s10, %s8
  $region1: #{tpu_custom_call.1} parent=0
    #allocation2 [shape = 'u8[262144]{0}', space=vmem, size = 0x40000, scoped, tag = 'input window, operand 3, single buffered']
    #allocation3 [shape = 's32[1]{0}', space=sflag, size = 0x4, scoped, tag = 'scoped memory for tpu_custom_call.1']
    #allocation4 [shape = 's32[1]{0}', space=sflag, size = 0x4, scoped, tag = 'scoped memory for tpu_custom_call.1']
    #allocation5 [shape = 'u8[65536]{0}', space=vmem, size = 0x10000, scoped, tag = 'output window, operand 0, single buffered']
    %12 = vsyncpa [#allocation3], 0
    %13 = vsyncpa [#allocation4], 0
    // Predicated region
    $region2: #{tpu_custom_call.1} parent=1 // pred_check
      _
    $region3: #{tpu_custom_call.1} parent=1 // pred_check_branch
      %15 = sbr.rel (0) target = $region5
    $region4: #{tpu_custom_call.1} parent=1 // pred_region
      _
    $region5: #{tpu_custom_call.1} parent=1 // pred_fallthru
      _
    // Predicated region
    $region6: #{tpu_custom_call.1} parent=1 // pred_check
      _
    $region7: #{tpu_custom_call.1} parent=1 // pred_check_branch
      %17 = sbr.rel (0) target = $region9
    $region8: #{tpu_custom_call.1} parent=1 // pred_region
      _
    $region9: #{tpu_custom_call.1} parent=1 // pred_fallthru
      _
    // Predicated region
    $region10: #{tpu_custom_call.1} parent=1 // pred_check
      _
    $region11: #{tpu_custom_call.1} parent=1 // pred_check_branch
      %19 = sbr.rel (0) target = $region13
    $region12: #{tpu_custom_call.1} parent=1 // pred_region
      _
    $region13: #{tpu_custom_call.1} parent=1 // pred_fallthru
      _
    // Predicated region
    $region14: #{tpu_custom_call.1} parent=1 // pred_check
      _
    $region15: #{tpu_custom_call.1} parent=1 // pred_check_branch
      %21 = sbr.rel (0) target = $region17
    $region16: #{tpu_custom_call.1} parent=1 // pred_region
      %s23 = ssub.s32 8192, 8192
      %24 = vsyncadd [#allocation3], %s23
      %s25 = sshll.u32 [#allocation2], 4
      %s26 = int_to_ptr.vmem [resolvable:$true] %s25
      %31 = dma.hbm_to_vmem [thread:$0]  %s3, 8192, %s26, [#allocation3], 512, 512, 32
    $region17: #{tpu_custom_call.1} parent=1 // pred_fallthru
      _
    // Predicated region
    $region18: #{tpu_custom_call.1} parent=1 // pred_check
      _
    $region19: #{tpu_custom_call.1} parent=1 // pred_check_branch
      %33 = sbr.rel (0) target = $region21
    $region20: #{tpu_custom_call.1} parent=1 // pred_region
      _
    $region21: #{tpu_custom_call.1} parent=1 // pred_fallthru
      _
    // Predicated region
    $region22: #{tpu_custom_call.1} parent=1 // pred_check
      _
    $region23: #{tpu_custom_call.1} parent=1 // pred_check_branch
      %35 = sbr.rel (0) target = $region25
    $region24: #{tpu_custom_call.1} parent=1 // pred_region
      _
    $region25: #{tpu_custom_call.1} parent=1 // pred_fallthru
      _
    // Predicated region
    $region26: #{tpu_custom_call.1} parent=1 // pred_check
      _
    $region27: #{tpu_custom_call.1} parent=1 // pred_check_branch
      %37 = sbr.rel (0) target = $region29
    $region28: #{tpu_custom_call.1} parent=1 // pred_region
      _
    $region29: #{tpu_custom_call.1} parent=1 // pred_fallthru
      _
    // Predicated region
    $region30: #{tpu_custom_call.1} parent=1 // pred_check
      _
    $region31: #{tpu_custom_call.1} parent=1 // pred_check_branch
      %39 = sbr.rel (0) target = $region33
    $region32: #{tpu_custom_call.1} parent=1 // pred_region
      %40 = dma.done [#allocation3], 8192
    $region33: #{tpu_custom_call.1} parent=1 // pred_fallthru
      _
    %v41 = vld [vmem:[%s0] sm:$0xff]
    %v42 = vld [vmem:[%s0 + $0x8] sm:$0xff]
    %v43 = vld [vmem:[%s0 + $0x10] sm:$0xff]
    %v44 = vld [vmem:[%s0 + $0x18] sm:$0xff]
    %v45 = vld [vmem:[%s0 + $0x20] sm:$0xff]
    %v46 = vld [vmem:[%s0 + $0x28] sm:$0xff]
    %v47 = vld [vmem:[%s0 + $0x30] sm:$0xff]
    %v48 = vld [vmem:[%s0 + $0x38] sm:$0xff]
    %v49 = vld [vmem:[%s0 + $0x40] sm:$0xff]
    %v50 = vld [vmem:[%s0 + $0x48] sm:$0xff]
    %v51 = vld [vmem:[%s0 + $0x50] sm:$0xff]
    %v52 = vld [vmem:[%s0 + $0x58] sm:$0xff]
    %v53 = vld [vmem:[%s0 + $0x60] sm:$0xff]
    %v54 = vld [vmem:[%s0 + $0x68] sm:$0xff]
    %v55 = vld [vmem:[%s0 + $0x70] sm:$0xff]
    %v56 = vld [vmem:[%s0 + $0x78] sm:$0xff]
    %v57 = vld [vmem:[%s1] sm:$0xff]
    %v58 = vld [vmem:[%s1 + $0x8] sm:$0xff]
    %v59 = vld [vmem:[%s1 + $0x10] sm:$0xff]
    %v60 = vld [vmem:[%s1 + $0x18] sm:$0xff]
    %v61 = vld [vmem:[%s1 + $0x20] sm:$0xff]
    %v62 = vld [vmem:[%s1 + $0x28] sm:$0xff]
    %v63 = vld [vmem:[%s1 + $0x30] sm:$0xff]
    %v64 = vld [vmem:[%s1 + $0x38] sm:$0xff]
    %v65 = vld [vmem:[%s1 + $0x40] sm:$0xff]
    %v66 = vld [vmem:[%s1 + $0x48] sm:$0xff]
    %v67 = vld [vmem:[%s1 + $0x50] sm:$0xff]
    %v68 = vld [vmem:[%s1 + $0x58] sm:$0xff]
    %v69 = vld [vmem:[%s1 + $0x60] sm:$0xff]
    %v70 = vld [vmem:[%s1 + $0x68] sm:$0xff]
    %v71 = vld [vmem:[%s1 + $0x70] sm:$0xff]
    %v72 = vld [vmem:[%s1 + $0x78] sm:$0xff]
    %v73 = vld [vmem:[%s2] sm:$0x1]
    %v75 = vlaneseq
    %v76 = vshrl.u32 %v75, 7
    %v77 = vsub.s32 0, %v76
    %v78 = vrot.slane %v73, %v77
    %80 = vmatprep.subr.mxu0 0.0
    %81 = vmatpush1.msra.mxu0 %v57
    %82 = vmatprep.subr.mxu0 0.0
    %83 = vmatpush1.msra.mxu0 %v58
    %84 = vmatprep.subr.mxu0 0.0
    %85 = vmatpush1.msra.mxu0 %v59
    %86 = vmatprep.subr.mxu0 0.0
    %87 = vmatpush1.msra.mxu0 %v60
    %88 = vmatprep.subr.mxu0 0.0
    %89 = vmatpush1.msra.mxu0 %v61
    %90 = vmatprep.subr.mxu0 0.0
    %91 = vmatpush1.msra.mxu0 %v62
    %92 = vmatprep.subr.mxu0 0.0
    %93 = vmatpush1.msra.mxu0 %v63
    %94 = vmatprep.subr.mxu0 0.0
    %95 = vmatpush1.msra.mxu0 %v64
    %96 = vmatprep.subr.mxu0 0.0
    %97 = vmatpush1.msra.mxu0 %v65
    %98 = vmatprep.subr.mxu0 0.0
    %99 = vmatpush1.msra.mxu0 %v66
    %100 = vmatprep.subr.mxu0 0.0
    %101 = vmatpush1.msra.mxu0 %v67
    %102 = vmatprep.subr.mxu0 0.0
    %103 = vmatpush1.msra.mxu0 %v68
    %104 = vmatprep.subr.mxu0 0.0
    %105 = vmatpush1.msra.mxu0 %v69
    %106 = vmatprep.subr.mxu0 0.0
    %107 = vmatpush1.msra.mxu0 %v70
    %108 = vmatprep.subr.mxu0 0.0
    %109 = vmatpush1.msra.mxu0 %v71
    %110 = vmatprep.subr.mxu0 0.0
    %111 = vmatpush1.msra.mxu0 %v72
    %112 = vmatprep.subr.mxu0 0.0
    %113 = vmatpush1.msra.mxu0 0.0
    %114 = vmatprep.subr.mxu0 0.0
    %115 = vmatpush1.msra.mxu0 0.0
    %116 = vmatprep.subr.mxu0 0.0
    %117 = vmatpush1.msra.mxu0 0.0
    %118 = vmatprep.subr.mxu0 0.0
    %119 = vmatpush1.msra.mxu0 0.0
    %120 = vmatprep.subr.mxu0 0.0
    %121 = vmatpush1.msra.mxu0 0.0
    %122 = vmatprep.subr.mxu0 0.0
    %123 = vmatpush1.msra.mxu0 0.0
    %124 = vmatprep.subr.mxu0 0.0
    %125 = vmatpush1.msra.mxu0 0.0
    %126 = vmatprep.subr.mxu0 0.0
    %127 = vmatpush1.msra.mxu0 0.0
    %128 = vmatprep.subr.mxu0 0.0
    %129 = vmatpush1.msra.mxu0 0.0
    %130 = vmatprep.subr.mxu0 0.0
    %131 = vmatpush1.msra.mxu0 0.0
    %132 = vmatprep.subr.mxu0 0.0
    %133 = vmatpush1.msra.mxu0 0.0
    %134 = vmatprep.subr.mxu0 0.0
    %135 = vmatpush1.msra.mxu0 0.0
    %136 = vmatprep.subr.mxu0 0.0
    %137 = vmatpush1.msra.mxu0 0.0
    %138 = vmatprep.subr.mxu0 0.0
    %139 = vmatpush1.msra.mxu0 0.0
    %140 = vmatprep.subr.mxu0 0.0
    %141 = vmatpush1.msra.mxu0 0.0
    %142 = vmatprep.subr.mxu0 0.0
    %143 = vmatpush1.msra.mxu0 0.0
    %144 = vmatprep.mubr.f32.mxu0 0.0
    %145 = vmatmul.mubr.f32.gmra.mrb[0].mxu0 %v41
    %v146 = vpop.f32.mrb[0].mxu0
    %v147 = vadd.f32 %v78, %v146
    %v148 = vpop.f32.mrb[0].mxu0
    %149 = vmatprep.mubr.f32.mxu0 0.0
    %150 = vmatmul.mubr.f32.gmra.mrb[0].mxu0 %v42
    %v151 = vpop.f32.mrb[0].mxu0
    %v152 = vadd.f32 %v78, %v151
    %v153 = vpop.f32.mrb[0].mxu0
    %154 = vmatprep.mubr.f32.mxu0 0.0
    %155 = vmatmul.mubr.f32.gmra.mrb[0].mxu0 %v43
    %v156 = vpop.f32.mrb[0].mxu0
    %v157 = vadd.f32 %v78, %v156
    %v158 = vpop.f32.mrb[0].mxu0
    %159 = vmatprep.mubr.f32.mxu0 0.0
    %160 = vmatmul.mubr.f32.gmra.mrb[0].mxu0 %v44
    %v161 = vpop.f32.mrb[0].mxu0
    %v162 = vadd.f32 %v78, %v161
    %v163 = vpop.f32.mrb[0].mxu0
    %164 = vmatprep.mubr.f32.mxu0 0.0
    %165 = vmatmul.mubr.f32.gmra.mrb[0].mxu0 %v45
    %v166 = vpop.f32.mrb[0].mxu0
    %v167 = vadd.f32 %v78, %v166
    %v168 = vpop.f32.mrb[0].mxu0
    %169 = vmatprep.mubr.f32.mxu0 0.0
    %170 = vmatmul.mubr.f32.gmra.mrb[0].mxu0 %v46
    %v171 = vpop.f32.mrb[0].mxu0
    %v172 = vadd.f32 %v78, %v171
    %v173 = vpop.f32.mrb[0].mxu0
    %174 = vmatprep.mubr.f32.mxu0 0.0
    %175 = vmatmul.mubr.f32.gmra.mrb[0].mxu0 %v47
    %v176 = vpop.f32.mrb[0].mxu0
    %v177 = vadd.f32 %v78, %v176
    %v178 = vpop.f32.mrb[0].mxu0
    %179 = vmatprep.mubr.f32.mxu0 0.0
    %180 = vmatmul.mubr.f32.gmra.mrb[0].mxu0 %v48
    %v181 = vpop.f32.mrb[0].mxu0
    %v182 = vadd.f32 %v78, %v181
    %v183 = vpop.f32.mrb[0].mxu0
    %184 = vmatprep.mubr.f32.mxu0 0.0
    %185 = vmatmul.mubr.f32.gmra.mrb[0].mxu0 %v49
    %v186 = vpop.f32.mrb[0].mxu0
    %v187 = vadd.f32 %v78, %v186
    %v188 = vpop.f32.mrb[0].mxu0
    %189 = vmatprep.mubr.f32.mxu0 0.0
    %190 = vmatmul.mubr.f32.gmra.mrb[0].mxu0 %v50
    %v191 = vpop.f32.mrb[0].mxu0
    %v192 = vadd.f32 %v78, %v191
    %v193 = vpop.f32.mrb[0].mxu0
    %194 = vmatprep.mubr.f32.mxu0 0.0
    %195 = vmatmul.mubr.f32.gmra.mrb[0].mxu0 %v51
    %v196 = vpop.f32.mrb[0].mxu0
    %v197 = vadd.f32 %v78, %v196
    %v198 = vpop.f32.mrb[0].mxu0
    %199 = vmatprep.mubr.f32.mxu0 0.0
    %200 = vmatmul.mubr.f32.gmra.mrb[0].mxu0 %v52
    %v201 = vpop.f32.mrb[0].mxu0
    %v202 = vadd.f32 %v78, %v201
    %v203 = vpop.f32.mrb[0].mxu0
    %204 = vmatprep.mubr.f32.mxu0 0.0
    %205 = vmatmul.mubr.f32.gmra.mrb[0].mxu0 %v53
    %v206 = vpop.f32.mrb[0].mxu0
    %v207 = vadd.f32 %v78, %v206
    %v208 = vpop.f32.mrb[0].mxu0
    %209 = vmatprep.mubr.f32.mxu0 0.0
    %210 = vmatmul.mubr.f32.gmra.mrb[0].mxu0 %v54
    %v211 = vpop.f32.mrb[0].mxu0
    %v212 = vadd.f32 %v78, %v211
    %v213 = vpop.f32.mrb[0].mxu0
    %214 = vmatprep.mubr.f32.mxu0 0.0
    %215 = vmatmul.mubr.f32.gmra.mrb[0].mxu0 %v55
    %v216 = vpop.f32.mrb[0].mxu0
    %v217 = vadd.f32 %v78, %v216
    %v218 = vpop.f32.mrb[0].mxu0
    %219 = vmatprep.mubr.f32.mxu0 0.0
    %220 = vmatmul.mubr.f32.gmra.mrb[0].mxu0 %v56
    %v221 = vpop.f32.mrb[0].mxu0
    %v222 = vadd.f32 %v78, %v221
    %v223 = vpop.f32.mrb[0].mxu0
    %224 = vdwg.mxu0
    %vm225 = vcmask 31744
    %v226 = vsel %vm225, %v147, -inf
    %227 = vmax.xlane.f32.xlu0 %v226
    %v228 = vpop.xlane.xlu0 %227
    %v229 = vsel %vm225, %v152, -inf
    %230 = vmax.xlane.f32.xlu0 %v229
    %v231 = vpop.xlane.xlu0 %230
    %v232 = vsel %vm225, %v157, -inf
    %233 = vmax.xlane.f32.xlu0 %v232
    %v234 = vpop.xlane.xlu0 %233
    %v235 = vsel %vm225, %v162, -inf
    %236 = vmax.xlane.f32.xlu0 %v235
    %v237 = vpop.xlane.xlu0 %236
    %v238 = vsel %vm225, %v167, -inf
    %239 = vmax.xlane.f32.xlu0 %v238
    %v240 = vpop.xlane.xlu0 %239
    %v241 = vsel %vm225, %v172, -inf
    %242 = vmax.xlane.f32.xlu0 %v241
    %v243 = vpop.xlane.xlu0 %242
    %v244 = vsel %vm225, %v177, -inf
    %245 = vmax.xlane.f32.xlu0 %v244
    %v246 = vpop.xlane.xlu0 %245
    %v247 = vsel %vm225, %v182, -inf
    %248 = vmax.xlane.f32.xlu0 %v247
    %v249 = vpop.xlane.xlu0 %248
    %v250 = vsel %vm225, %v187, -inf
    %251 = vmax.xlane.f32.xlu0 %v250
    %v252 = vpop.xlane.xlu0 %251
    %v253 = vsel %vm225, %v192, -inf
    %254 = vmax.xlane.f32.xlu0 %v253
    %v255 = vpop.xlane.xlu0 %254
    %v256 = vsel %vm225, %v197, -inf
    %257 = vmax.xlane.f32.xlu0 %v256
    %v258 = vpop.xlane.xlu0 %257
    %v259 = vsel %vm225, %v202, -inf
    %260 = vmax.xlane.f32.xlu0 %v259
    %v261 = vpop.xlane.xlu0 %260
    %v262 = vsel %vm225, %v207, -inf
    %263 = vmax.xlane.f32.xlu0 %v262
    %v264 = vpop.xlane.xlu0 %263
    %v265 = vsel %vm225, %v212, -inf
    %266 = vmax.xlane.f32.xlu0 %v265
    %v267 = vpop.xlane.xlu0 %266
    %v268 = vsel %vm225, %v217, -inf
    %269 = vmax.xlane.f32.xlu0 %v268
    %v270 = vpop.xlane.xlu0 %269
    %v271 = vsel %vm225, %v222, -inf
    %272 = vmax.xlane.f32.xlu0 %v271
    %v273 = vpop.xlane.xlu0 %272
    %v274 = vsub.f32 %v147, %v228
    %v275 = vsub.f32 %v152, %v231
    %v276 = vsub.f32 %v157, %v234
    %v277 = vsub.f32 %v162, %v237
    %v278 = vsub.f32 %v167, %v240
    %v279 = vsub.f32 %v172, %v243
    %v280 = vsub.f32 %v177, %v246
    %v281 = vsub.f32 %v182, %v249
    %v282 = vsub.f32 %v187, %v252
    %v283 = vsub.f32 %v192, %v255
    %v284 = vsub.f32 %v197, %v258
    %v285 = vsub.f32 %v202, %v261
    %v286 = vsub.f32 %v207, %v264
    %v287 = vsub.f32 %v212, %v267
    %v288 = vsub.f32 %v217, %v270
    %v289 = vsub.f32 %v222, %v273
    %v290 = vmul.f32 %v274, 1.442695
    %v291 = vpow.pop %v290
    %v292 = vmul.f32 %v275, 1.442695
    %v293 = vpow.pop %v292
    %v294 = vmul.f32 %v276, 1.442695
    %v295 = vpow.pop %v294
    %v296 = vmul.f32 %v277, 1.442695
    %v297 = vpow.pop %v296
    %v298 = vmul.f32 %v278, 1.442695
    %v299 = vpow.pop %v298
    %v300 = vmul.f32 %v279, 1.442695
    %v301 = vpow.pop %v300
    %v302 = vmul.f32 %v280, 1.442695
    %v303 = vpow.pop %v302
    %v304 = vmul.f32 %v281, 1.442695
    %v305 = vpow.pop %v304
    %v306 = vmul.f32 %v282, 1.442695
    %v307 = vpow.pop %v306
    %v308 = vmul.f32 %v283, 1.442695
    %v309 = vpow.pop %v308
    %v310 = vmul.f32 %v284, 1.442695
    %v311 = vpow.pop %v310
    %v312 = vmul.f32 %v285, 1.442695
    %v313 = vpow.pop %v312
    %v314 = vmul.f32 %v286, 1.442695
    %v315 = vpow.pop %v314
    %v316 = vmul.f32 %v287, 1.442695
    %v317 = vpow.pop %v316
    %v318 = vmul.f32 %v288, 1.442695
    %v319 = vpow.pop %v318
    %v320 = vmul.f32 %v289, 1.442695
    %v321 = vpow.pop %v320
    %v322 = vsel %vm225, %v291, 0.0
    %323 = vadd.xlane.f32.xlu0 %v322
    %v324 = vpop.xlane.xlu0 %323
    %v325 = vsel %vm225, %v293, 0.0
    %326 = vadd.xlane.f32.xlu0 %v325
    %v327 = vpop.xlane.xlu0 %326
    %v328 = vsel %vm225, %v295, 0.0
    %329 = vadd.xlane.f32.xlu0 %v328
    %v330 = vpop.xlane.xlu0 %329
    %v331 = vsel %vm225, %v297, 0.0
    %332 = vadd.xlane.f32.xlu0 %v331
    %v333 = vpop.xlane.xlu0 %332
    %v334 = vsel %vm225, %v299, 0.0
    %335 = vadd.xlane.f32.xlu0 %v334
    %v336 = vpop.xlane.xlu0 %335
    %v337 = vsel %vm225, %v301, 0.0
    %338 = vadd.xlane.f32.xlu0 %v337
    %v339 = vpop.xlane.xlu0 %338
    %v340 = vsel %vm225, %v303, 0.0
    %341 = vadd.xlane.f32.xlu0 %v340
    %v342 = vpop.xlane.xlu0 %341
    %v343 = vsel %vm225, %v305, 0.0
    %344 = vadd.xlane.f32.xlu0 %v343
    %v345 = vpop.xlane.xlu0 %344
    %v346 = vsel %vm225, %v307, 0.0
    %347 = vadd.xlane.f32.xlu0 %v346
    %v348 = vpop.xlane.xlu0 %347
    %v349 = vsel %vm225, %v309, 0.0
    %350 = vadd.xlane.f32.xlu0 %v349
    %v351 = vpop.xlane.xlu0 %350
    %v352 = vsel %vm225, %v311, 0.0
    %353 = vadd.xlane.f32.xlu0 %v352
    %v354 = vpop.xlane.xlu0 %353
    %v355 = vsel %vm225, %v313, 0.0
    %356 = vadd.xlane.f32.xlu0 %v355
    %v357 = vpop.xlane.xlu0 %356
    %v358 = vsel %vm225, %v315, 0.0
    %359 = vadd.xlane.f32.xlu0 %v358
    %v360 = vpop.xlane.xlu0 %359
    %v361 = vsel %vm225, %v317, 0.0
    %362 = vadd.xlane.f32.xlu0 %v361
    %v363 = vpop.xlane.xlu0 %362
    %v364 = vsel %vm225, %v319, 0.0
    %365 = vadd.xlane.f32.xlu0 %v364
    %v366 = vpop.xlane.xlu0 %365
    %v367 = vsel %vm225, %v321, 0.0
    %368 = vadd.xlane.f32.xlu0 %v367
    %v369 = vpop.xlane.xlu0 %368
    %v370 = vrcp.pop %v324
    %v371 = vmul.f32 %v291, %v370
    %v372 = vrcp.pop %v327
    %v373 = vmul.f32 %v293, %v372
    %v374 = vrcp.pop %v330
    %v375 = vmul.f32 %v295, %v374
    %v376 = vrcp.pop %v333
    %v377 = vmul.f32 %v297, %v376
    %v378 = vrcp.pop %v336
    %v379 = vmul.f32 %v299, %v378
    %v380 = vrcp.pop %v339
    %v381 = vmul.f32 %v301, %v380
    %v382 = vrcp.pop %v342
    %v383 = vmul.f32 %v303, %v382
    %v384 = vrcp.pop %v345
    %v385 = vmul.f32 %v305, %v384
    %v386 = vrcp.pop %v348
    %v387 = vmul.f32 %v307, %v386
    %v388 = vrcp.pop %v351
    %v389 = vmul.f32 %v309, %v388
    %v390 = vrcp.pop %v354
    %v391 = vmul.f32 %v311, %v390
    %v392 = vrcp.pop %v357
    %v393 = vmul.f32 %v313, %v392
    %v394 = vrcp.pop %v360
    %v395 = vmul.f32 %v315, %v394
    %v396 = vrcp.pop %v363
    %v397 = vmul.f32 %v317, %v396
    %v398 = vrcp.pop %v366
    %v399 = vmul.f32 %v319, %v398
    %v400 = vrcp.pop %v369
    %v401 = vmul.f32 %v321, %v400
    %v402 = vld [vmem:[#allocation2] sm:$0xff]
    %v403 = vld [vmem:[#allocation2 + $0x8] sm:$0xff]
    %v404 = vld [vmem:[#allocation2 + $0x10] sm:$0xff]
    %v405 = vld [vmem:[#allocation2 + $0x18] sm:$0xff]
    %v406 = vld [vmem:[#allocation2 + $0x20] sm:$0xff]
    %v407 = vld [vmem:[#allocation2 + $0x28] sm:$0xff]
    %v408 = vld [vmem:[#allocation2 + $0x30] sm:$0xff]
    %v409 = vld [vmem:[#allocation2 + $0x38] sm:$0xff]
    %v410 = vld [vmem:[#allocation2 + $0x40] sm:$0xff]
    %v411 = vld [vmem:[#allocation2 + $0x48] sm:$0xff]
    %v412 = vld [vmem:[#allocation2 + $0x50] sm:$0xff]
    %v413 = vld [vmem:[#allocation2 + $0x58] sm:$0xff]
    %v414 = vld [vmem:[#allocation2 + $0x60] sm:$0xff]
    %v415 = vld [vmem:[#allocation2 + $0x68] sm:$0xff]
    %v416 = vld [vmem:[#allocation2 + $0x70] sm:$0xff]
    %v417 = vld [vmem:[#allocation2 + $0x78] sm:$0xff]
    %v418 = vld [vmem:[#allocation2 + $0x80] sm:$0xff]
    %v419 = vld [vmem:[#allocation2 + $0x88] sm:$0xff]
    %v420 = vld [vmem:[#allocation2 + $0x90] sm:$0xff]
    %v421 = vld [vmem:[#allocation2 + $0x98] sm:$0xff]
    %v422 = vld [vmem:[#allocation2 + $0xa0] sm:$0xff]
    %v423 = vld [vmem:[#allocation2 + $0xa8] sm:$0xff]
    %v424 = vld [vmem:[#allocation2 + $0xb0] sm:$0xff]
    %v425 = vld [vmem:[#allocation2 + $0xb8] sm:$0xff]
    %v426 = vld [vmem:[#allocation2 + $0xc0] sm:$0xff]
    %v427 = vld [vmem:[#allocation2 + $0xc8] sm:$0xff]
    %v428 = vld [vmem:[#allocation2 + $0xd0] sm:$0xff]
    %v429 = vld [vmem:[#allocation2 + $0xd8] sm:$0xff]
    %v430 = vld [vmem:[#allocation2 + $0xe0] sm:$0xff]
    %v431 = vld [vmem:[#allocation2 + $0xe8] sm:$0xff]
    %v432 = vld [vmem:[#allocation2 + $0xf0] sm:$0xff]
    %v433 = vld [vmem:[#allocation2 + $0xf8] sm:$0xff]
    %v434 = vld [vmem:[#allocation2 + $0x100] sm:$0xff]
    %v435 = vld [vmem:[#allocation2 + $0x108] sm:$0xff]
    %v436 = vld [vmem:[#allocation2 + $0x110] sm:$0xff]
    %v437 = vld [vmem:[#allocation2 + $0x118] sm:$0xff]
    %v438 = vld [vmem:[#allocation2 + $0x120] sm:$0xff]
    %v439 = vld [vmem:[#allocation2 + $0x128] sm:$0xff]
    %v440 = vld [vmem:[#allocation2 + $0x130] sm:$0xff]
    %v441 = vld [vmem:[#allocation2 + $0x138] sm:$0xff]
    %v442 = vld [vmem:[#allocation2 + $0x140] sm:$0xff]
    %v443 = vld [vmem:[#allocation2 + $0x148] sm:$0xff]
    %v444 = vld [vmem:[#allocation2 + $0x150] sm:$0xff]
    %v445 = vld [vmem:[#allocation2 + $0x158] sm:$0xff]
    %v446 = vld [vmem:[#allocation2 + $0x160] sm:$0xff]
    %v447 = vld [vmem:[#allocation2 + $0x168] sm:$0xff]
    %v448 = vld [vmem:[#allocation2 + $0x170] sm:$0xff]
    %v449 = vld [vmem:[#allocation2 + $0x178] sm:$0xff]
    %v450 = vld [vmem:[#allocation2 + $0x180] sm:$0xff]
    %v451 = vld [vmem:[#allocation2 + $0x188] sm:$0xff]
    %v452 = vld [vmem:[#allocation2 + $0x190] sm:$0xff]
    %v453 = vld [vmem:[#allocation2 + $0x198] sm:$0xff]
    %v454 = vld [vmem:[#allocation2 + $0x1a0] sm:$0xff]
    %v455 = vld [vmem:[#allocation2 + $0x1a8] sm:$0xff]
    %v456 = vld [vmem:[#allocation2 + $0x1b0] sm:$0xff]
    %v457 = vld [vmem:[#allocation2 + $0x1b8] sm:$0xff]
    %v458 = vld [vmem:[#allocation2 + $0x1c0] sm:$0xff]
    %v459 = vld [vmem:[#allocation2 + $0x1c8] sm:$0xff]
    %v460 = vld [vmem:[#allocation2 + $0x1d0] sm:$0xff]
    %v461 = vld [vmem:[#allocation2 + $0x1d8] sm:$0xff]
    %v462 = vld [vmem:[#allocation2 + $0x1e0] sm:$0xff]
    %v463 = vld [vmem:[#allocation2 + $0x1e8] sm:$0xff]
    %v464 = vld [vmem:[#allocation2 + $0x1f0] sm:$0xff]
    %v465 = vld [vmem:[#allocation2 + $0x1f8] sm:$0xff]
    %466 = vmatprep.subr.mxu0 %v403
    %467 = vmatpush1.msra.mxu0 %v402
    %468 = vmatprep.subr.mxu0 %v407
    %469 = vmatpush1.msra.mxu0 %v406
    %470 = vmatprep.subr.mxu0 %v411
    %471 = vmatpush1.msra.mxu0 %v410
    %472 = vmatprep.subr.mxu0 %v415
    %473 = vmatpush1.msra.mxu0 %v414
    %474 = vmatprep.subr.mxu0 %v419
    %475 = vmatpush1.msra.mxu0 %v418
    %476 = vmatprep.subr.mxu0 %v423
    %477 = vmatpush1.msra.mxu0 %v422
    %478 = vmatprep.subr.mxu0 %v427
    %479 = vmatpush1.msra.mxu0 %v426
    %480 = vmatprep.subr.mxu0 %v431
    %481 = vmatpush1.msra.mxu0 %v430
    %482 = vmatprep.subr.mxu0 %v435
    %483 = vmatpush1.msra.mxu0 %v434
    %484 = vmatprep.subr.mxu0 %v439
    %485 = vmatpush1.msra.mxu0 %v438
    %486 = vmatprep.subr.mxu0 %v443
    %487 = vmatpush1.msra.mxu0 %v442
    %488 = vmatprep.subr.mxu0 %v447
    %489 = vmatpush1.msra.mxu0 %v446
    %490 = vmatprep.subr.mxu0 %v451
    %491 = vmatpush1.msra.mxu0 %v450
    %492 = vmatprep.subr.mxu0 %v455
    %493 = vmatpush1.msra.mxu0 %v454
    %494 = vmatprep.subr.mxu0 %v459
    %495 = vmatpush1.msra.mxu0 %v458
    %496 = vmatprep.subr.mxu0 %v463
    %497 = vmatpush1.msra.mxu0 %v462
    %498 = vmatprep.subr.mxu0 0.0
    %499 = vmatpush1.msra.mxu0 0.0
    %500 = vmatprep.subr.mxu0 0.0
    %501 = vmatpush1.msra.mxu0 0.0
    %502 = vmatprep.subr.mxu0 0.0
    %503 = vmatpush1.msra.mxu0 0.0
    %504 = vmatprep.subr.mxu0 0.0
    %505 = vmatpush1.msra.mxu0 0.0
    %506 = vmatprep.subr.mxu0 0.0
    %507 = vmatpush1.msra.mxu0 0.0
    %508 = vmatprep.subr.mxu0 0.0
    %509 = vmatpush1.msra.mxu0 0.0
    %510 = vmatprep.subr.mxu0 0.0
    %511 = vmatpush1.msra.mxu0 0.0
    %512 = vmatprep.subr.mxu0 0.0
    %513 = vmatpush1.msra.mxu0 0.0
    %514 = vmatprep.subr.mxu0 0.0
    %515 = vmatpush1.msra.mxu0 0.0
    %516 = vmatprep.subr.mxu0 0.0
    %517 = vmatpush1.msra.mxu0 0.0
    %518 = vmatprep.subr.mxu0 0.0
    %519 = vmatpush1.msra.mxu0 0.0
    %520 = vmatprep.subr.mxu0 0.0
    %521 = vmatpush1.msra.mxu0 0.0
    %522 = vmatprep.subr.mxu0 0.0
    %523 = vmatpush1.msra.mxu0 0.0
    %524 = vmatprep.subr.mxu0 0.0
    %525 = vmatpush1.msra.mxu0 0.0
    %526 = vmatprep.subr.mxu0 0.0
    %527 = vmatpush1.msra.mxu0 0.0
    %528 = vmatprep.subr.mxu0 0.0
    %529 = vmatpush1.msra.mxu0 0.0
    %530 = vmatprep.mubr.f32.mxu0 0.0
    %531 = vmatmul.mubr.f32.gmra.mrb[0].mxu0 %v41
    %v532 = vpop.f32.mrb[0].mxu0
    %v533 = vadd.f32 0.0, %v532
    %v534 = vpop.f32.mrb[0].mxu0
    %v535 = vadd.f32 0.0, %v534
    %536 = vmatprep.mubr.f32.mxu0 0.0
    %537 = vmatmul.mubr.f32.gmra.mrb[0].mxu0 %v42
    %v538 = vpop.f32.mrb[0].mxu0
    %v539 = vadd.f32 0.0, %v538
    %v540 = vpop.f32.mrb[0].mxu0
    %v541 = vadd.f32 0.0, %v540
    %542 = vmatprep.mubr.f32.mxu0 0.0
    %543 = vmatmul.mubr.f32.gmra.mrb[0].mxu0 %v43
    %v544 = vpop.f32.mrb[0].mxu0
    %v545 = vadd.f32 0.0, %v544
    %v546 = vpop.f32.mrb[0].mxu0
    %v547 = vadd.f32 0.0, %v546
    %548 = vmatprep.mubr.f32.mxu0 0.0
    %549 = vmatmul.mubr.f32.gmra.mrb[0].mxu0 %v44
    %v550 = vpop.f32.mrb[0].mxu0
    %v551 = vadd.f32 0.0, %v550
    %v552 = vpop.f32.mrb[0].mxu0
    %v553 = vadd.f32 0.0, %v552
    %554 = vmatprep.mubr.f32.mxu0 0.0
    %555 = vmatmul.mubr.f32.gmra.mrb[0].mxu0 %v45
    %v556 = vpop.f32.mrb[0].mxu0
    %v557 = vadd.f32 0.0, %v556
    %v558 = vpop.f32.mrb[0].mxu0
    %v559 = vadd.f32 0.0, %v558
    %560 = vmatprep.mubr.f32.mxu0 0.0
    %561 = vmatmul.mubr.f32.gmra.mrb[0].mxu0 %v46
    %v562 = vpop.f32.mrb[0].mxu0
    %v563 = vadd.f32 0.0, %v562
    %v564 = vpop.f32.mrb[0].mxu0
    %v565 = vadd.f32 0.0, %v564
    %566 = vmatprep.mubr.f32.mxu0 0.0
    %567 = vmatmul.mubr.f32.gmra.mrb[0].mxu0 %v47
    %v568 = vpop.f32.mrb[0].mxu0
    %v569 = vadd.f32 0.0, %v568
    %v570 = vpop.f32.mrb[0].mxu0
    %v571 = vadd.f32 0.0, %v570
    %572 = vmatprep.mubr.f32.mxu0 0.0
    %573 = vmatmul.mubr.f32.gmra.mrb[0].mxu0 %v48
    %v574 = vpop.f32.mrb[0].mxu0
    %v575 = vadd.f32 0.0, %v574
    %v576 = vpop.f32.mrb[0].mxu0
    %v577 = vadd.f32 0.0, %v576
    %578 = vmatprep.mubr.f32.mxu0 0.0
    %579 = vmatmul.mubr.f32.gmra.mrb[0].mxu0 %v49
    %v580 = vpop.f32.mrb[0].mxu0
    %v581 = vadd.f32 0.0, %v580
    %v582 = vpop.f32.mrb[0].mxu0
    %v583 = vadd.f32 0.0, %v582
    %584 = vmatprep.mubr.f32.mxu0 0.0
    %585 = vmatmul.mubr.f32.gmra.mrb[0].mxu0 %v50
    %v586 = vpop.f32.mrb[0].mxu0
    %v587 = vadd.f32 0.0, %v586
    %v588 = vpop.f32.mrb[0].mxu0
    %v589 = vadd.f32 0.0, %v588
    %590 = vmatprep.mubr.f32.mxu0 0.0
    %591 = vmatmul.mubr.f32.gmra.mrb[0].mxu0 %v51
    %v592 = vpop.f32.mrb[0].mxu0
    %v593 = vadd.f32 0.0, %v592
    %v594 = vpop.f32.mrb[0].mxu0
    %v595 = vadd.f32 0.0, %v594
    %596 = vmatprep.mubr.f32.mxu0 0.0
    %597 = vmatmul.mubr.f32.gmra.mrb[0].mxu0 %v52
    %v598 = vpop.f32.mrb[0].mxu0
    %v599 = vadd.f32 0.0, %v598
    %v600 = vpop.f32.mrb[0].mxu0
    %v601 = vadd.f32 0.0, %v600
    %602 = vmatprep.mubr.f32.mxu0 0.0
    %603 = vmatmul.mubr.f32.gmra.mrb[0].mxu0 %v53
    %v604 = vpop.f32.mrb[0].mxu0
    %v605 = vadd.f32 0.0, %v604
    %v606 = vpop.f32.mrb[0].mxu0
    %v607 = vadd.f32 0.0, %v606
    %608 = vmatprep.mubr.f32.mxu0 0.0
    %609 = vmatmul.mubr.f32.gmra.mrb[0].mxu0 %v54
    %v610 = vpop.f32.mrb[0].mxu0
    %v611 = vadd.f32 0.0, %v610
    %v612 = vpop.f32.mrb[0].mxu0
    %v613 = vadd.f32 0.0, %v612
    %614 = vmatprep.mubr.f32.mxu0 0.0
    %615 = vmatmul.mubr.f32.gmra.mrb[0].mxu0 %v55
    %v616 = vpop.f32.mrb[0].mxu0
    %v617 = vadd.f32 0.0, %v616
    %v618 = vpop.f32.mrb[0].mxu0
    %v619 = vadd.f32 0.0, %v618
    %620 = vmatprep.mubr.f32.mxu0 0.0
    %621 = vmatmul.mubr.f32.gmra.mrb[0].mxu0 %v56
    %v622 = vpop.f32.mrb[0].mxu0
    %v623 = vadd.f32 0.0, %v622
    %v624 = vpop.f32.mrb[0].mxu0
    %v625 = vadd.f32 0.0, %v624
    %626 = vdwg.mxu0
    %627 = vmatprep.subr.mxu0 %v405
    %628 = vmatpush1.msra.mxu0 %v404
    %629 = vmatprep.subr.mxu0 %v409
    %630 = vmatpush1.msra.mxu0 %v408
    %631 = vmatprep.subr.mxu0 %v413
    %632 = vmatpush1.msra.mxu0 %v412
    %633 = vmatprep.subr.mxu0 %v417
    %634 = vmatpush1.msra.mxu0 %v416
    %635 = vmatprep.subr.mxu0 %v421
    %636 = vmatpush1.msra.mxu0 %v420
    %637 = vmatprep.subr.mxu0 %v425
    %638 = vmatpush1.msra.mxu0 %v424
    %639 = vmatprep.subr.mxu0 %v429
    %640 = vmatpush1.msra.mxu0 %v428
    %641 = vmatprep.subr.mxu0 %v433
    %642 = vmatpush1.msra.mxu0 %v432
    %643 = vmatprep.subr.mxu0 %v437
    %644 = vmatpush1.msra.mxu0 %v436
    %645 = vmatprep.subr.mxu0 %v441
    %646 = vmatpush1.msra.mxu0 %v440
    %647 = vmatprep.subr.mxu0 %v445
    %648 = vmatpush1.msra.mxu0 %v444
    %649 = vmatprep.subr.mxu0 %v449
    %650 = vmatpush1.msra.mxu0 %v448
    %651 = vmatprep.subr.mxu0 %v453
    %652 = vmatpush1.msra.mxu0 %v452
    %653 = vmatprep.subr.mxu0 %v457
    %654 = vmatpush1.msra.mxu0 %v456
    %655 = vmatprep.subr.mxu0 %v461
    %656 = vmatpush1.msra.mxu0 %v460
    %657 = vmatprep.subr.mxu0 %v465
    %658 = vmatpush1.msra.mxu0 %v464
    %659 = vmatprep.subr.mxu0 0.0
    %660 = vmatpush1.msra.mxu0 0.0
    %661 = vmatprep.subr.mxu0 0.0
    %662 = vmatpush1.msra.mxu0 0.0
    %663 = vmatprep.subr.mxu0 0.0
    %664 = vmatpush1.msra.mxu0 0.0
    %665 = vmatprep.subr.mxu0 0.0
    %666 = vmatpush1.msra.mxu0 0.0
    %667 = vmatprep.subr.mxu0 0.0
    %668 = vmatpush1.msra.mxu0 0.0
    %669 = vmatprep.subr.mxu0 0.0
    %670 = vmatpush1.msra.mxu0 0.0
    %671 = vmatprep.subr.mxu0 0.0
    %672 = vmatpush1.msra.mxu0 0.0
    %673 = vmatprep.subr.mxu0 0.0
    %674 = vmatpush1.msra.mxu0 0.0
    %675 = vmatprep.subr.mxu0 0.0
    %676 = vmatpush1.msra.mxu0 0.0
    %677 = vmatprep.subr.mxu0 0.0
    %678 = vmatpush1.msra.mxu0 0.0
    %679 = vmatprep.subr.mxu0 0.0
    %680 = vmatpush1.msra.mxu0 0.0
    %681 = vmatprep.subr.mxu0 0.0
    %682 = vmatpush1.msra.mxu0 0.0
    %683 = vmatprep.subr.mxu0 0.0
    %684 = vmatpush1.msra.mxu0 0.0
    %685 = vmatprep.subr.mxu0 0.0
    %686 = vmatpush1.msra.mxu0 0.0
    %687 = vmatprep.subr.mxu0 0.0
    %688 = vmatpush1.msra.mxu0 0.0
    %689 = vmatprep.subr.mxu0 0.0
    %690 = vmatpush1.msra.mxu0 0.0
    %691 = vmatprep.mubr.f32.mxu0 0.0
    %692 = vmatmul.mubr.f32.gmra.mrb[0].mxu0 %v41
    %v693 = vpop.f32.mrb[0].mxu0
    %v694 = vadd.f32 0.0, %v693
    %v695 = vpop.f32.mrb[0].mxu0
    %v696 = vadd.f32 0.0, %v695
    %697 = vmatprep.mubr.f32.mxu0 0.0
    %698 = vmatmul.mubr.f32.gmra.mrb[0].mxu0 %v42
    %v699 = vpop.f32.mrb[0].mxu0
    %v700 = vadd.f32 0.0, %v699
    %v701 = vpop.f32.mrb[0].mxu0
    %v702 = vadd.f32 0.0, %v701
    %703 = vmatprep.mubr.f32.mxu0 0.0
    %704 = vmatmul.mubr.f32.gmra.mrb[0].mxu0 %v43
    %v705 = vpop.f32.mrb[0].mxu0
    %v706 = vadd.f32 0.0, %v705
    %v707 = vpop.f32.mrb[0].mxu0
    %v708 = vadd.f32 0.0, %v707
    %709 = vmatprep.mubr.f32.mxu0 0.0
    %710 = vmatmul.mubr.f32.gmra.mrb[0].mxu0 %v44
    %v711 = vpop.f32.mrb[0].mxu0
    %v712 = vadd.f32 0.0, %v711
    %v713 = vpop.f32.mrb[0].mxu0
    %v714 = vadd.f32 0.0, %v713
    %715 = vmatprep.mubr.f32.mxu0 0.0
    %716 = vmatmul.mubr.f32.gmra.mrb[0].mxu0 %v45
    %v717 = vpop.f32.mrb[0].mxu0
    %v718 = vadd.f32 0.0, %v717
    %v719 = vpop.f32.mrb[0].mxu0
    %v720 = vadd.f32 0.0, %v719
    %721 = vmatprep.mubr.f32.mxu0 0.0
    %722 = vmatmul.mubr.f32.gmra.mrb[0].mxu0 %v46
    %v723 = vpop.f32.mrb[0].mxu0
    %v724 = vadd.f32 0.0, %v723
    %v725 = vpop.f32.mrb[0].mxu0
    %v726 = vadd.f32 0.0, %v725
    %727 = vmatprep.mubr.f32.mxu0 0.0
    %728 = vmatmul.mubr.f32.gmra.mrb[0].mxu0 %v47
    %v729 = vpop.f32.mrb[0].mxu0
    %v730 = vadd.f32 0.0, %v729
    %v731 = vpop.f32.mrb[0].mxu0
    %v732 = vadd.f32 0.0, %v731
    %733 = vmatprep.mubr.f32.mxu0 0.0
    %734 = vmatmul.mubr.f32.gmra.mrb[0].mxu0 %v48
    %v735 = vpop.f32.mrb[0].mxu0
    %v736 = vadd.f32 0.0, %v735
    %v737 = vpop.f32.mrb[0].mxu0
    %v738 = vadd.f32 0.0, %v737
    %739 = vmatprep.mubr.f32.mxu0 0.0
    %740 = vmatmul.mubr.f32.gmra.mrb[0].mxu0 %v49
    %v741 = vpop.f32.mrb[0].mxu0
    %v742 = vadd.f32 0.0, %v741
    %v743 = vpop.f32.mrb[0].mxu0
    %v744 = vadd.f32 0.0, %v743
    %745 = vmatprep.mubr.f32.mxu0 0.0
    %746 = vmatmul.mubr.f32.gmra.mrb[0].mxu0 %v50
    %v747 = vpop.f32.mrb[0].mxu0
    %v748 = vadd.f32 0.0, %v747
    %v749 = vpop.f32.mrb[0].mxu0
    %v750 = vadd.f32 0.0, %v749
    %751 = vmatprep.mubr.f32.mxu0 0.0
    %752 = vmatmul.mubr.f32.gmra.mrb[0].mxu0 %v51
    %v753 = vpop.f32.mrb[0].mxu0
    %v754 = vadd.f32 0.0, %v753
    %v755 = vpop.f32.mrb[0].mxu0
    %v756 = vadd.f32 0.0, %v755
    %757 = vmatprep.mubr.f32.mxu0 0.0
    %758 = vmatmul.mubr.f32.gmra.mrb[0].mxu0 %v52
    %v759 = vpop.f32.mrb[0].mxu0
    %v760 = vadd.f32 0.0, %v759
    %v761 = vpop.f32.mrb[0].mxu0
    %v762 = vadd.f32 0.0, %v761
    %763 = vmatprep.mubr.f32.mxu0 0.0
    %764 = vmatmul.mubr.f32.gmra.mrb[0].mxu0 %v53
    %v765 = vpop.f32.mrb[0].mxu0
    %v766 = vadd.f32 0.0, %v765
    %v767 = vpop.f32.mrb[0].mxu0
    %v768 = vadd.f32 0.0, %v767
    %769 = vmatprep.mubr.f32.mxu0 0.0
    %770 = vmatmul.mubr.f32.gmra.mrb[0].mxu0 %v54
    %v771 = vpop.f32.mrb[0].mxu0
    %v772 = vadd.f32 0.0, %v771
    %v773 = vpop.f32.mrb[0].mxu0
    %v774 = vadd.f32 0.0, %v773
    %775 = vmatprep.mubr.f32.mxu0 0.0
    %776 = vmatmul.mubr.f32.gmra.mrb[0].mxu0 %v55
    %v777 = vpop.f32.mrb[0].mxu0
    %v778 = vadd.f32 0.0, %v777
    %v779 = vpop.f32.mrb[0].mxu0
    %v780 = vadd.f32 0.0, %v779
    %781 = vmatprep.mubr.f32.mxu0 0.0
    %782 = vmatmul.mubr.f32.gmra.mrb[0].mxu0 %v56
    %v783 = vpop.f32.mrb[0].mxu0
    %v784 = vadd.f32 0.0, %v783
    %v785 = vpop.f32.mrb[0].mxu0
    %v786 = vadd.f32 0.0, %v785
    %787 = vdwg.mxu0
    %v788 = vld [vmem:[%s4] sm:$0xf]
    %v789 = vlaneseq
    %v790 = vshrl.u32 %v789, 7
    %v791 = vsub.s32 0, %v790
    %v792 = vrot.slane %v788, %v791
    %v793 = vadd.f32 %v533, %v792
    %v794 = vadd.f32 %v539, %v792
    %v795 = vadd.f32 %v545, %v792
    %v796 = vadd.f32 %v551, %v792
    %v797 = vadd.f32 %v557, %v792
    %v798 = vadd.f32 %v563, %v792
    %v799 = vadd.f32 %v569, %v792
    %v800 = vadd.f32 %v575, %v792
    %v801 = vadd.f32 %v581, %v792
    %v802 = vadd.f32 %v587, %v792
    %v803 = vadd.f32 %v593, %v792
    %v804 = vadd.f32 %v599, %v792
    %v805 = vadd.f32 %v605, %v792
    %v806 = vadd.f32 %v611, %v792
    %v807 = vadd.f32 %v617, %v792
    %v808 = vadd.f32 %v623, %v792
    %810 = vset.pattern.permute.xlu0 0
    %811 = vperm.xlu0 %810, %v371
    %v812 = vpop.permute.xlu0 %811
    %815 = vset.pattern.permute.xlu0 0
    %816 = vperm.xlu0 %815, %v373
    %v817 = vpop.permute.xlu0 %816
    %820 = vset.pattern.permute.xlu0 0
    %821 = vperm.xlu0 %820, %v375
    %v822 = vpop.permute.xlu0 %821
    %825 = vset.pattern.permute.xlu0 0
    %826 = vperm.xlu0 %825, %v377
    %v827 = vpop.permute.xlu0 %826
    %830 = vset.pattern.permute.xlu0 0
    %831 = vperm.xlu0 %830, %v379
    %v832 = vpop.permute.xlu0 %831
    %835 = vset.pattern.permute.xlu0 0
    %836 = vperm.xlu0 %835, %v381
    %v837 = vpop.permute.xlu0 %836
    %840 = vset.pattern.permute.xlu0 0
    %841 = vperm.xlu0 %840, %v383
    %v842 = vpop.permute.xlu0 %841
    %845 = vset.pattern.permute.xlu0 0
    %846 = vperm.xlu0 %845, %v385
    %v847 = vpop.permute.xlu0 %846
    %850 = vset.pattern.permute.xlu0 0
    %851 = vperm.xlu0 %850, %v387
    %v852 = vpop.permute.xlu0 %851
    %855 = vset.pattern.permute.xlu0 0
    %856 = vperm.xlu0 %855, %v389
    %v857 = vpop.permute.xlu0 %856
    %860 = vset.pattern.permute.xlu0 0
    %861 = vperm.xlu0 %860, %v391
    %v862 = vpop.permute.xlu0 %861
    %865 = vset.pattern.permute.xlu0 0
    %866 = vperm.xlu0 %865, %v393
    %v867 = vpop.permute.xlu0 %866
    %870 = vset.pattern.permute.xlu0 0
    %871 = vperm.xlu0 %870, %v395
    %v872 = vpop.permute.xlu0 %871
    %875 = vset.pattern.permute.xlu0 0
    %876 = vperm.xlu0 %875, %v397
    %v877 = vpop.permute.xlu0 %876
    %880 = vset.pattern.permute.xlu0 0
    %881 = vperm.xlu0 %880, %v399
    %v882 = vpop.permute.xlu0 %881
    %885 = vset.pattern.permute.xlu0 0
    %886 = vperm.xlu0 %885, %v401
    %v887 = vpop.permute.xlu0 %886
    %v889 = vmul.f32 %v812, %v793
    %v890 = vmul.f32 %v817, %v794
    %v891 = vmul.f32 %v822, %v795
    %v892 = vmul.f32 %v827, %v796
    %v893 = vmul.f32 %v832, %v797
    %v894 = vmul.f32 %v837, %v798
    %v895 = vmul.f32 %v842, %v799
    %v896 = vmul.f32 %v847, %v800
    %v897 = vmul.f32 %v852, %v801
    %v898 = vmul.f32 %v857, %v802
    %v899 = vmul.f32 %v862, %v803
    %v900 = vmul.f32 %v867, %v804
    %v901 = vmul.f32 %v872, %v805
    %v902 = vmul.f32 %v877, %v806
    %v903 = vmul.f32 %v882, %v807
    %v904 = vmul.f32 %v887, %v808
    %v905 = vlaneseq
    %v906 = vshrl.u32 %v905, 7
    %v907 = vsub.s32 1, %v906
    %v908 = vrot.slane %v788, %v907
    %v909 = vadd.f32 %v535, %v908
    %v910 = vadd.f32 %v541, %v908
    %v911 = vadd.f32 %v547, %v908
    %v912 = vadd.f32 %v553, %v908
    %v913 = vadd.f32 %v559, %v908
    %v914 = vadd.f32 %v565, %v908
    %v915 = vadd.f32 %v571, %v908
    %v916 = vadd.f32 %v577, %v908
    %v917 = vadd.f32 %v583, %v908
    %v918 = vadd.f32 %v589, %v908
    %v919 = vadd.f32 %v595, %v908
    %v920 = vadd.f32 %v601, %v908
    %v921 = vadd.f32 %v607, %v908
    %v922 = vadd.f32 %v613, %v908
    %v923 = vadd.f32 %v619, %v908
    %v924 = vadd.f32 %v625, %v908
    %925 = vset.pattern.permute.xlu0 1
    %926 = vperm.xlu0 %925, %v371
    %v927 = vpop.permute.xlu0 %926
    %929 = vset.pattern.permute.xlu0 1
    %930 = vperm.xlu0 %929, %v373
    %v931 = vpop.permute.xlu0 %930
    %933 = vset.pattern.permute.xlu0 1
    %934 = vperm.xlu0 %933, %v375
    %v935 = vpop.permute.xlu0 %934
    %937 = vset.pattern.permute.xlu0 1
    %938 = vperm.xlu0 %937, %v377
    %v939 = vpop.permute.xlu0 %938
    %941 = vset.pattern.permute.xlu0 1
    %942 = vperm.xlu0 %941, %v379
    %v943 = vpop.permute.xlu0 %942
    %945 = vset.pattern.permute.xlu0 1
    %946 = vperm.xlu0 %945, %v381
    %v947 = vpop.permute.xlu0 %946
    %949 = vset.pattern.permute.xlu0 1
    %950 = vperm.xlu0 %949, %v383
    %v951 = vpop.permute.xlu0 %950
    %953 = vset.pattern.permute.xlu0 1
    %954 = vperm.xlu0 %953, %v385
    %v955 = vpop.permute.xlu0 %954
    %957 = vset.pattern.permute.xlu0 1
    %958 = vperm.xlu0 %957, %v387
    %v959 = vpop.permute.xlu0 %958
    %961 = vset.pattern.permute.xlu0 1
    %962 = vperm.xlu0 %961, %v389
    %v963 = vpop.permute.xlu0 %962
    %965 = vset.pattern.permute.xlu0 1
    %966 = vperm.xlu0 %965, %v391
    %v967 = vpop.permute.xlu0 %966
    %969 = vset.pattern.permute.xlu0 1
    %970 = vperm.xlu0 %969, %v393
    %v971 = vpop.permute.xlu0 %970
    %973 = vset.pattern.permute.xlu0 1
    %974 = vperm.xlu0 %973, %v395
    %v975 = vpop.permute.xlu0 %974
    %977 = vset.pattern.permute.xlu0 1
    %978 = vperm.xlu0 %977, %v397
    %v979 = vpop.permute.xlu0 %978
    %981 = vset.pattern.permute.xlu0 1
    %982 = vperm.xlu0 %981, %v399
    %v983 = vpop.permute.xlu0 %982
    %985 = vset.pattern.permute.xlu0 1
    %986 = vperm.xlu0 %985, %v401
    %v987 = vpop.permute.xlu0 %986
    %v989 = vmul.f32 %v927, %v909
    %v990 = vmul.f32 %v931, %v910
    %v991 = vmul.f32 %v935, %v911
    %v992 = vmul.f32 %v939, %v912
    %v993 = vmul.f32 %v943, %v913
    %v994 = vmul.f32 %v947, %v914
    %v995 = vmul.f32 %v951, %v915
    %v996 = vmul.f32 %v955, %v916
    %v997 = vmul.f32 %v959, %v917
    %v998 = vmul.f32 %v963, %v918
    %v999 = vmul.f32 %v967, %v919
    %v1000 = vmul.f32 %v971, %v920
    %v1001 = vmul.f32 %v975, %v921
    %v1002 = vmul.f32 %v979, %v922
    %v1003 = vmul.f32 %v983, %v923
    %v1004 = vmul.f32 %v987, %v924
    %v1005 = vadd.f32 %v889, %v989
    %v1006 = vadd.f32 %v890, %v990
    %v1007 = vadd.f32 %v891, %v991
    %v1008 = vadd.f32 %v892, %v992
    %v1009 = vadd.f32 %v893, %v993
    %v1010 = vadd.f32 %v894, %v994
    %v1011 = vadd.f32 %v895, %v995
    %v1012 = vadd.f32 %v896, %v996
    %v1013 = vadd.f32 %v897, %v997
    %v1014 = vadd.f32 %v898, %v998
    %v1015 = vadd.f32 %v899, %v999
    %v1016 = vadd.f32 %v900, %v1000
    %v1017 = vadd.f32 %v901, %v1001
    %v1018 = vadd.f32 %v902, %v1002
    %v1019 = vadd.f32 %v903, %v1003
    %v1020 = vadd.f32 %v904, %v1004
    %v1021 = vlaneseq
    %v1022 = vshrl.u32 %v1021, 7
    %v1023 = vsub.s32 2, %v1022
    %v1024 = vrot.slane %v788, %v1023
    %v1025 = vadd.f32 %v694, %v1024
    %v1026 = vadd.f32 %v700, %v1024
    %v1027 = vadd.f32 %v706, %v1024
    %v1028 = vadd.f32 %v712, %v1024
    %v1029 = vadd.f32 %v718, %v1024
    %v1030 = vadd.f32 %v724, %v1024
    %v1031 = vadd.f32 %v730, %v1024
    %v1032 = vadd.f32 %v736, %v1024
    %v1033 = vadd.f32 %v742, %v1024
    %v1034 = vadd.f32 %v748, %v1024
    %v1035 = vadd.f32 %v754, %v1024
    %v1036 = vadd.f32 %v760, %v1024
    %v1037 = vadd.f32 %v766, %v1024
    %v1038 = vadd.f32 %v772, %v1024
    %v1039 = vadd.f32 %v778, %v1024
    %v1040 = vadd.f32 %v784, %v1024
    %1041 = vset.pattern.permute.xlu0 2
    %1042 = vperm.xlu0 %1041, %v371
    %v1043 = vpop.permute.xlu0 %1042
    %1045 = vset.pattern.permute.xlu0 2
    %1046 = vperm.xlu0 %1045, %v373
    %v1047 = vpop.permute.xlu0 %1046
    %1049 = vset.pattern.permute.xlu0 2
    %1050 = vperm.xlu0 %1049, %v375
    %v1051 = vpop.permute.xlu0 %1050
    %1053 = vset.pattern.permute.xlu0 2
    %1054 = vperm.xlu0 %1053, %v377
    %v1055 = vpop.permute.xlu0 %1054
    %1057 = vset.pattern.permute.xlu0 2
    %1058 = vperm.xlu0 %1057, %v379
    %v1059 = vpop.permute.xlu0 %1058
    %1061 = vset.pattern.permute.xlu0 2
    %1062 = vperm.xlu0 %1061, %v381
    %v1063 = vpop.permute.xlu0 %1062
    %1065 = vset.pattern.permute.xlu0 2
    %1066 = vperm.xlu0 %1065, %v383
    %v1067 = vpop.permute.xlu0 %1066
    %1069 = vset.pattern.permute.xlu0 2
    %1070 = vperm.xlu0 %1069, %v385
    %v1071 = vpop.permute.xlu0 %1070
    %1073 = vset.pattern.permute.xlu0 2
    %1074 = vperm.xlu0 %1073, %v387
    %v1075 = vpop.permute.xlu0 %1074
    %1077 = vset.pattern.permute.xlu0 2
    %1078 = vperm.xlu0 %1077, %v389
    %v1079 = vpop.permute.xlu0 %1078
    %1081 = vset.pattern.permute.xlu0 2
    %1082 = vperm.xlu0 %1081, %v391
    %v1083 = vpop.permute.xlu0 %1082
    %1085 = vset.pattern.permute.xlu0 2
    %1086 = vperm.xlu0 %1085, %v393
    %v1087 = vpop.permute.xlu0 %1086
    %1089 = vset.pattern.permute.xlu0 2
    %1090 = vperm.xlu0 %1089, %v395
    %v1091 = vpop.permute.xlu0 %1090
    %1093 = vset.pattern.permute.xlu0 2
    %1094 = vperm.xlu0 %1093, %v397
    %v1095 = vpop.permute.xlu0 %1094
    %1097 = vset.pattern.permute.xlu0 2
    %1098 = vperm.xlu0 %1097, %v399
    %v1099 = vpop.permute.xlu0 %1098
    %1101 = vset.pattern.permute.xlu0 2
    %1102 = vperm.xlu0 %1101, %v401
    %v1103 = vpop.permute.xlu0 %1102
    %v1105 = vmul.f32 %v1043, %v1025
    %v1106 = vmul.f32 %v1047, %v1026
    %v1107 = vmul.f32 %v1051, %v1027
    %v1108 = vmul.f32 %v1055, %v1028
    %v1109 = vmul.f32 %v1059, %v1029
    %v1110 = vmul.f32 %v1063, %v1030
    %v1111 = vmul.f32 %v1067, %v1031
    %v1112 = vmul.f32 %v1071, %v1032
    %v1113 = vmul.f32 %v1075, %v1033
    %v1114 = vmul.f32 %v1079, %v1034
    %v1115 = vmul.f32 %v1083, %v1035
    %v1116 = vmul.f32 %v1087, %v1036
    %v1117 = vmul.f32 %v1091, %v1037
    %v1118 = vmul.f32 %v1095, %v1038
    %v1119 = vmul.f32 %v1099, %v1039
    %v1120 = vmul.f32 %v1103, %v1040
    %v1121 = vadd.f32 %v1005, %v1105
    %v1122 = vadd.f32 %v1006, %v1106
    %v1123 = vadd.f32 %v1007, %v1107
    %v1124 = vadd.f32 %v1008, %v1108
    %v1125 = vadd.f32 %v1009, %v1109
    %v1126 = vadd.f32 %v1010, %v1110
    %v1127 = vadd.f32 %v1011, %v1111
    %v1128 = vadd.f32 %v1012, %v1112
    %v1129 = vadd.f32 %v1013, %v1113
    %v1130 = vadd.f32 %v1014, %v1114
    %v1131 = vadd.f32 %v1015, %v1115
    %v1132 = vadd.f32 %v1016, %v1116
    %v1133 = vadd.f32 %v1017, %v1117
    %v1134 = vadd.f32 %v1018, %v1118
    %v1135 = vadd.f32 %v1019, %v1119
    %v1136 = vadd.f32 %v1020, %v1120
    %v1137 = vlaneseq
    %v1138 = vshrl.u32 %v1137, 7
    %v1139 = vsub.s32 3, %v1138
    %v1140 = vrot.slane %v788, %v1139
    %v1141 = vadd.f32 %v696, %v1140
    %v1142 = vadd.f32 %v702, %v1140
    %v1143 = vadd.f32 %v708, %v1140
    %v1144 = vadd.f32 %v714, %v1140
    %v1145 = vadd.f32 %v720, %v1140
    %v1146 = vadd.f32 %v726, %v1140
    %v1147 = vadd.f32 %v732, %v1140
    %v1148 = vadd.f32 %v738, %v1140
    %v1149 = vadd.f32 %v744, %v1140
    %v1150 = vadd.f32 %v750, %v1140
    %v1151 = vadd.f32 %v756, %v1140
    %v1152 = vadd.f32 %v762, %v1140
    %v1153 = vadd.f32 %v768, %v1140
    %v1154 = vadd.f32 %v774, %v1140
    %v1155 = vadd.f32 %v780, %v1140
    %v1156 = vadd.f32 %v786, %v1140
    %1157 = vset.pattern.permute.xlu0 3
    %1158 = vperm.xlu0 %1157, %v371
    %v1159 = vpop.permute.xlu0 %1158
    %1161 = vset.pattern.permute.xlu0 3
    %1162 = vperm.xlu0 %1161, %v373
    %v1163 = vpop.permute.xlu0 %1162
    %1165 = vset.pattern.permute.xlu0 3
    %1166 = vperm.xlu0 %1165, %v375
    %v1167 = vpop.permute.xlu0 %1166
    %1169 = vset.pattern.permute.xlu0 3
    %1170 = vperm.xlu0 %1169, %v377
    %v1171 = vpop.permute.xlu0 %1170
    %1173 = vset.pattern.permute.xlu0 3
    %1174 = vperm.xlu0 %1173, %v379
    %v1175 = vpop.permute.xlu0 %1174
    %1177 = vset.pattern.permute.xlu0 3
    %1178 = vperm.xlu0 %1177, %v381
    %v1179 = vpop.permute.xlu0 %1178
    %1181 = vset.pattern.permute.xlu0 3
    %1182 = vperm.xlu0 %1181, %v383
    %v1183 = vpop.permute.xlu0 %1182
    %1185 = vset.pattern.permute.xlu0 3
    %1186 = vperm.xlu0 %1185, %v385
    %v1187 = vpop.permute.xlu0 %1186
    %1189 = vset.pattern.permute.xlu0 3
    %1190 = vperm.xlu0 %1189, %v387
    %v1191 = vpop.permute.xlu0 %1190
    %1193 = vset.pattern.permute.xlu0 3
    %1194 = vperm.xlu0 %1193, %v389
    %v1195 = vpop.permute.xlu0 %1194
    %1197 = vset.pattern.permute.xlu0 3
    %1198 = vperm.xlu0 %1197, %v391
    %v1199 = vpop.permute.xlu0 %1198
    %1201 = vset.pattern.permute.xlu0 3
    %1202 = vperm.xlu0 %1201, %v393
    %v1203 = vpop.permute.xlu0 %1202
    %1205 = vset.pattern.permute.xlu0 3
    %1206 = vperm.xlu0 %1205, %v395
    %v1207 = vpop.permute.xlu0 %1206
    %1209 = vset.pattern.permute.xlu0 3
    %1210 = vperm.xlu0 %1209, %v397
    %v1211 = vpop.permute.xlu0 %1210
    %1213 = vset.pattern.permute.xlu0 3
    %1214 = vperm.xlu0 %1213, %v399
    %v1215 = vpop.permute.xlu0 %1214
    %1217 = vset.pattern.permute.xlu0 3
    %1218 = vperm.xlu0 %1217, %v401
    %v1219 = vpop.permute.xlu0 %1218
    %v1221 = vmul.f32 %v1159, %v1141
    %v1222 = vmul.f32 %v1163, %v1142
    %v1223 = vmul.f32 %v1167, %v1143
    %v1224 = vmul.f32 %v1171, %v1144
    %v1225 = vmul.f32 %v1175, %v1145
    %v1226 = vmul.f32 %v1179, %v1146
    %v1227 = vmul.f32 %v1183, %v1147
    %v1228 = vmul.f32 %v1187, %v1148
    %v1229 = vmul.f32 %v1191, %v1149
    %v1230 = vmul.f32 %v1195, %v1150
    %v1231 = vmul.f32 %v1199, %v1151
    %v1232 = vmul.f32 %v1203, %v1152
    %v1233 = vmul.f32 %v1207, %v1153
    %v1234 = vmul.f32 %v1211, %v1154
    %v1235 = vmul.f32 %v1215, %v1155
    %v1236 = vmul.f32 %v1219, %v1156
    %v1237 = vadd.f32 %v1121, %v1221
    %v1238 = vadd.f32 %v1122, %v1222
    %v1239 = vadd.f32 %v1123, %v1223
    %v1240 = vadd.f32 %v1124, %v1224
    %v1241 = vadd.f32 %v1125, %v1225
    %v1242 = vadd.f32 %v1126, %v1226
    %v1243 = vadd.f32 %v1127, %v1227
    %v1244 = vadd.f32 %v1128, %v1228
    %v1245 = vadd.f32 %v1129, %v1229
    %v1246 = vadd.f32 %v1130, %v1230
    %v1247 = vadd.f32 %v1131, %v1231
    %v1248 = vadd.f32 %v1132, %v1232
    %v1249 = vadd.f32 %v1133, %v1233
    %v1250 = vadd.f32 %v1134, %v1234
    %v1251 = vadd.f32 %v1135, %v1235
    %v1252 = vadd.f32 %v1136, %v1236
    %v1253 = vadd.f32 %v41, %v1237
    %v1254 = vadd.f32 %v42, %v1238
    %v1255 = vadd.f32 %v43, %v1239
    %v1256 = vadd.f32 %v44, %v1240
    %v1257 = vadd.f32 %v45, %v1241
    %v1258 = vadd.f32 %v46, %v1242
    %v1259 = vadd.f32 %v47, %v1243
    %v1260 = vadd.f32 %v48, %v1244
    %v1261 = vadd.f32 %v49, %v1245
    %v1262 = vadd.f32 %v50, %v1246
    %v1263 = vadd.f32 %v51, %v1247
    %v1264 = vadd.f32 %v52, %v1248
    %v1265 = vadd.f32 %v53, %v1249
    %v1266 = vadd.f32 %v54, %v1250
    %v1267 = vadd.f32 %v55, %v1251
    %v1268 = vadd.f32 %v56, %v1252
    %1269 = vadd.xlane.f32.xlu0 %v1253
    %v1270 = vpop.xlane.xlu0 %1269
    %1271 = vadd.xlane.f32.xlu0 %v1254
    %v1272 = vpop.xlane.xlu0 %1271
    %1273 = vadd.xlane.f32.xlu0 %v1255
    %v1274 = vpop.xlane.xlu0 %1273
    %1275 = vadd.xlane.f32.xlu0 %v1256
    %v1276 = vpop.xlane.xlu0 %1275
    %1277 = vadd.xlane.f32.xlu0 %v1257
    %v1278 = vpop.xlane.xlu0 %1277
    %1279 = vadd.xlane.f32.xlu0 %v1258
    %v1280 = vpop.xlane.xlu0 %1279
    %1281 = vadd.xlane.f32.xlu0 %v1259
    %v1282 = vpop.xlane.xlu0 %1281
    %1283 = vadd.xlane.f32.xlu0 %v1260
    %v1284 = vpop.xlane.xlu0 %1283
    %1285 = vadd.xlane.f32.xlu0 %v1261
    %v1286 = vpop.xlane.xlu0 %1285
    %1287 = vadd.xlane.f32.xlu0 %v1262
    %v1288 = vpop.xlane.xlu0 %1287
    %1289 = vadd.xlane.f32.xlu0 %v1263
    %v1290 = vpop.xlane.xlu0 %1289
    %1291 = vadd.xlane.f32.xlu0 %v1264
    %v1292 = vpop.xlane.xlu0 %1291
    %1293 = vadd.xlane.f32.xlu0 %v1265
    %v1294 = vpop.xlane.xlu0 %1293
    %1295 = vadd.xlane.f32.xlu0 %v1266
    %v1296 = vpop.xlane.xlu0 %1295
    %1297 = vadd.xlane.f32.xlu0 %v1267
    %v1298 = vpop.xlane.xlu0 %1297
    %1299 = vadd.xlane.f32.xlu0 %v1268
    %v1300 = vpop.xlane.xlu0 %1299
    %v1301 = vrcp.pop 128.0
    %v1302 = vmul.f32 %v1270, %v1301
    %v1303 = vmul.f32 %v1272, %v1301
    %v1304 = vmul.f32 %v1274, %v1301
    %v1305 = vmul.f32 %v1276, %v1301
    %v1306 = vmul.f32 %v1278, %v1301
    %v1307 = vmul.f32 %v1280, %v1301
    %v1308 = vmul.f32 %v1282, %v1301
    %v1309 = vmul.f32 %v1284, %v1301
    %v1310 = vmul.f32 %v1286, %v1301
    %v1311 = vmul.f32 %v1288, %v1301
    %v1312 = vmul.f32 %v1290, %v1301
    %v1313 = vmul.f32 %v1292, %v1301
    %v1314 = vmul.f32 %v1294, %v1301
    %v1315 = vmul.f32 %v1296, %v1301
    %v1316 = vmul.f32 %v1298, %v1301
    %v1317 = vmul.f32 %v1300, %v1301
    %v1318 = vsub.f32 %v1253, %v1302
    %v1319 = vsub.f32 %v1254, %v1303
    %v1320 = vsub.f32 %v1255, %v1304
    %v1321 = vsub.f32 %v1256, %v1305
    %v1322 = vsub.f32 %v1257, %v1306
    %v1323 = vsub.f32 %v1258, %v1307
    %v1324 = vsub.f32 %v1259, %v1308
    %v1325 = vsub.f32 %v1260, %v1309
    %v1326 = vsub.f32 %v1261, %v1310
    %v1327 = vsub.f32 %v1262, %v1311
    %v1328 = vsub.f32 %v1263, %v1312
    %v1329 = vsub.f32 %v1264, %v1313
    %v1330 = vsub.f32 %v1265, %v1314
    %v1331 = vsub.f32 %v1266, %v1315
    %v1332 = vsub.f32 %v1267, %v1316
    %v1333 = vsub.f32 %v1268, %v1317
    %v1334 = vmul.f32 %v1318, %v1318
    %v1335 = vmul.f32 %v1319, %v1319
    %v1336 = vmul.f32 %v1320, %v1320
    %v1337 = vmul.f32 %v1321, %v1321
    %v1338 = vmul.f32 %v1322, %v1322
    %v1339 = vmul.f32 %v1323, %v1323
    %v1340 = vmul.f32 %v1324, %v1324
    %v1341 = vmul.f32 %v1325, %v1325
    %v1342 = vmul.f32 %v1326, %v1326
    %v1343 = vmul.f32 %v1327, %v1327
    %v1344 = vmul.f32 %v1328, %v1328
    %v1345 = vmul.f32 %v1329, %v1329
    %v1346 = vmul.f32 %v1330, %v1330
    %v1347 = vmul.f32 %v1331, %v1331
    %v1348 = vmul.f32 %v1332, %v1332
    %v1349 = vmul.f32 %v1333, %v1333
    %1350 = vadd.xlane.f32.xlu0 %v1334
    %v1351 = vpop.xlane.xlu0 %1350
    %1352 = vadd.xlane.f32.xlu0 %v1335
    %v1353 = vpop.xlane.xlu0 %1352
    %1354 = vadd.xlane.f32.xlu0 %v1336
    %v1355 = vpop.xlane.xlu0 %1354
    %1356 = vadd.xlane.f32.xlu0 %v1337
    %v1357 = vpop.xlane.xlu0 %1356
    %1358 = vadd.xlane.f32.xlu0 %v1338
    %v1359 = vpop.xlane.xlu0 %1358
    %1360 = vadd.xlane.f32.xlu0 %v1339
    %v1361 = vpop.xlane.xlu0 %1360
    %1362 = vadd.xlane.f32.xlu0 %v1340
    %v1363 = vpop.xlane.xlu0 %1362
    %1364 = vadd.xlane.f32.xlu0 %v1341
    %v1365 = vpop.xlane.xlu0 %1364
    %1366 = vadd.xlane.f32.xlu0 %v1342
    %v1367 = vpop.xlane.xlu0 %1366
    %1368 = vadd.xlane.f32.xlu0 %v1343
    %v1369 = vpop.xlane.xlu0 %1368
    %1370 = vadd.xlane.f32.xlu0 %v1344
    %v1371 = vpop.xlane.xlu0 %1370
    %1372 = vadd.xlane.f32.xlu0 %v1345
    %v1373 = vpop.xlane.xlu0 %1372
    %1374 = vadd.xlane.f32.xlu0 %v1346
    %v1375 = vpop.xlane.xlu0 %1374
    %1376 = vadd.xlane.f32.xlu0 %v1347
    %v1377 = vpop.xlane.xlu0 %1376
    %1378 = vadd.xlane.f32.xlu0 %v1348
    %v1379 = vpop.xlane.xlu0 %1378
    %1380 = vadd.xlane.f32.xlu0 %v1349
    %v1381 = vpop.xlane.xlu0 %1380
    %v1382 = vmul.f32 %v1351, %v1301
    %v1383 = vmul.f32 %v1353, %v1301
    %v1384 = vmul.f32 %v1355, %v1301
    %v1385 = vmul.f32 %v1357, %v1301
    %v1386 = vmul.f32 %v1359, %v1301
    %v1387 = vmul.f32 %v1361, %v1301
    %v1388 = vmul.f32 %v1363, %v1301
    %v1389 = vmul.f32 %v1365, %v1301
    %v1390 = vmul.f32 %v1367, %v1301
    %v1391 = vmul.f32 %v1369, %v1301
    %v1392 = vmul.f32 %v1371, %v1301
    %v1393 = vmul.f32 %v1373, %v1301
    %v1394 = vmul.f32 %v1375, %v1301
    %v1395 = vmul.f32 %v1377, %v1301
    %v1396 = vmul.f32 %v1379, %v1301
    %v1397 = vmul.f32 %v1381, %v1301
    %v1398 = vadd.f32 %v1382, 1e-05
    %v1399 = vadd.f32 %v1383, 1e-05
    %v1400 = vadd.f32 %v1384, 1e-05
    %v1401 = vadd.f32 %v1385, 1e-05
    %v1402 = vadd.f32 %v1386, 1e-05
    %v1403 = vadd.f32 %v1387, 1e-05
    %v1404 = vadd.f32 %v1388, 1e-05
    %v1405 = vadd.f32 %v1389, 1e-05
    %v1406 = vadd.f32 %v1390, 1e-05
    %v1407 = vadd.f32 %v1391, 1e-05
    %v1408 = vadd.f32 %v1392, 1e-05
    %v1409 = vadd.f32 %v1393, 1e-05
    %v1410 = vadd.f32 %v1394, 1e-05
    %v1411 = vadd.f32 %v1395, 1e-05
    %v1412 = vadd.f32 %v1396, 1e-05
    %v1413 = vadd.f32 %v1397, 1e-05
    %v1414 = vrsqrt.pop %v1398
    %v1415 = vrsqrt.pop %v1399
    %v1416 = vrsqrt.pop %v1400
    %v1417 = vrsqrt.pop %v1401
    %v1418 = vrsqrt.pop %v1402
    %v1419 = vrsqrt.pop %v1403
    %v1420 = vrsqrt.pop %v1404
    %v1421 = vrsqrt.pop %v1405
    %v1422 = vrsqrt.pop %v1406
    %v1423 = vrsqrt.pop %v1407
    %v1424 = vrsqrt.pop %v1408
    %v1425 = vrsqrt.pop %v1409
    %v1426 = vrsqrt.pop %v1410
    %v1427 = vrsqrt.pop %v1411
    %v1428 = vrsqrt.pop %v1412
    %v1429 = vrsqrt.pop %v1413
    %v1430 = vmul.f32 %v1318, %v1414
    %v1431 = vmul.f32 %v1319, %v1415
    %v1432 = vmul.f32 %v1320, %v1416
    %v1433 = vmul.f32 %v1321, %v1417
    %v1434 = vmul.f32 %v1322, %v1418
    %v1435 = vmul.f32 %v1323, %v1419
    %v1436 = vmul.f32 %v1324, %v1420
    %v1437 = vmul.f32 %v1325, %v1421
    %v1438 = vmul.f32 %v1326, %v1422
    %v1439 = vmul.f32 %v1327, %v1423
    %v1440 = vmul.f32 %v1328, %v1424
    %v1441 = vmul.f32 %v1329, %v1425
    %v1442 = vmul.f32 %v1330, %v1426
    %v1443 = vmul.f32 %v1331, %v1427
    %v1444 = vmul.f32 %v1332, %v1428
    %v1445 = vmul.f32 %v1333, %v1429
    %v1446 = vld [vmem:[%s5] sm:$0x1]
    %v1448 = vlaneseq
    %v1449 = vshrl.u32 %v1448, 7
    %v1450 = vsub.s32 0, %v1449
    %v1451 = vrot.slane %v1446, %v1450
    %v1453 = vmul.f32 %v1430, %v1451
    %v1454 = vmul.f32 %v1431, %v1451
    %v1455 = vmul.f32 %v1432, %v1451
    %v1456 = vmul.f32 %v1433, %v1451
    %v1457 = vmul.f32 %v1434, %v1451
    %v1458 = vmul.f32 %v1435, %v1451
    %v1459 = vmul.f32 %v1436, %v1451
    %v1460 = vmul.f32 %v1437, %v1451
    %v1461 = vmul.f32 %v1438, %v1451
    %v1462 = vmul.f32 %v1439, %v1451
    %v1463 = vmul.f32 %v1440, %v1451
    %v1464 = vmul.f32 %v1441, %v1451
    %v1465 = vmul.f32 %v1442, %v1451
    %v1466 = vmul.f32 %v1443, %v1451
    %v1467 = vmul.f32 %v1444, %v1451
    %v1468 = vmul.f32 %v1445, %v1451
    %v1469 = vld [vmem:[%s6] sm:$0x1]
    %v1471 = vlaneseq
    %v1472 = vshrl.u32 %v1471, 7
    %v1473 = vsub.s32 0, %v1472
    %v1474 = vrot.slane %v1469, %v1473
    %v1476 = vadd.f32 %v1453, %v1474
    %v1477 = vadd.f32 %v1454, %v1474
    %v1478 = vadd.f32 %v1455, %v1474
    %v1479 = vadd.f32 %v1456, %v1474
    %v1480 = vadd.f32 %v1457, %v1474
    %v1481 = vadd.f32 %v1458, %v1474
    %v1482 = vadd.f32 %v1459, %v1474
    %v1483 = vadd.f32 %v1460, %v1474
    %v1484 = vadd.f32 %v1461, %v1474
    %v1485 = vadd.f32 %v1462, %v1474
    %v1486 = vadd.f32 %v1463, %v1474
    %v1487 = vadd.f32 %v1464, %v1474
    %v1488 = vadd.f32 %v1465, %v1474
    %v1489 = vadd.f32 %v1466, %v1474
    %v1490 = vadd.f32 %v1467, %v1474
    %v1491 = vadd.f32 %v1468, %v1474
    %1492 = vst [vmem:[#allocation5] sm:$0xff] %v1476
    %1493 = vst [vmem:[#allocation5 + $0x8] sm:$0xff] %v1477
    %1494 = vst [vmem:[#allocation5 + $0x10] sm:$0xff] %v1478
    %1495 = vst [vmem:[#allocation5 + $0x18] sm:$0xff] %v1479
    %1496 = vst [vmem:[#allocation5 + $0x20] sm:$0xff] %v1480
    %1497 = vst [vmem:[#allocation5 + $0x28] sm:$0xff] %v1481
    %1498 = vst [vmem:[#allocation5 + $0x30] sm:$0xff] %v1482
    %1499 = vst [vmem:[#allocation5 + $0x38] sm:$0xff] %v1483
    %1500 = vst [vmem:[#allocation5 + $0x40] sm:$0xff] %v1484
    %1501 = vst [vmem:[#allocation5 + $0x48] sm:$0xff] %v1485
    %1502 = vst [vmem:[#allocation5 + $0x50] sm:$0xff] %v1486
    %1503 = vst [vmem:[#allocation5 + $0x58] sm:$0xff] %v1487
    %1504 = vst [vmem:[#allocation5 + $0x60] sm:$0xff] %v1488
    %1505 = vst [vmem:[#allocation5 + $0x68] sm:$0xff] %v1489
    %1506 = vst [vmem:[#allocation5 + $0x70] sm:$0xff] %v1490
    %1507 = vst [vmem:[#allocation5 + $0x78] sm:$0xff] %v1491
    // Predicated region
    $region34: #{tpu_custom_call.1} parent=1 // pred_check
      _
    $region35: #{tpu_custom_call.1} parent=1 // pred_check_branch
      %1509 = sbr.rel (0) target = $region37
    $region36: #{tpu_custom_call.1} parent=1 // pred_region
      %s1511 = ssub.s32 2048, 2048
      %1512 = vsyncadd [#allocation4], %s1511
      %s1513 = sshll.u32 [#allocation5], 4
      %s1514 = int_to_ptr.vmem [resolvable:$true] %s1513
      %1519 = dma.vmem_to_hbm [thread:$0]  %s1514, 2048, %s7, [#allocation4], 128, 128, 8
    $region37: #{tpu_custom_call.1} parent=1 // pred_fallthru
      _
    // Predicated region
    $region38: #{tpu_custom_call.1} parent=1 // pred_check
      _
    $region39: #{tpu_custom_call.1} parent=1 // pred_check_branch
      %1521 = sbr.rel (0) target = $region41
    $region40: #{tpu_custom_call.1} parent=1 // pred_region
      %1522 = dma.done [#allocation4], 2048
    $region41: #{tpu_custom_call.1} parent=1 // pred_fallthru
      _
    %1523 = vsyncpa [#allocation3], 1
    %1524 = vsyncpa [#allocation4], 1

</llo_original>
